<compile_context>
chip_gen: v7x
topology: tpu7x:2x2x1
jax: 0.10.0
libtpu: 0.0.40
codegen_flags: <defaults>
</compile_context>

<pallas_src>
import numpy as np
import jax
import jax.numpy as jnp
from jax.experimental import pallas as pl
from jax.experimental.pallas import tpu as pltpu

D_POINTS = 32   # d_points
D_MODEL = 32    # d_model
K_NN = 8        # k neighbors


# ----------------------------------------------------------------------------- kernel
def _make_kernel(Mq, K, dp, dm):
    """Mq = number of query rows handled by one grid step."""
    MK = Mq * K
    inv_sqrt_dm = 1.0 / np.sqrt(dm)

    def kernel(qf_ref, sl_ref, wf_ref, w_ref, b_ref, res_ref, attn_ref):
        f32 = jnp.float32
        qf = qf_ref[...]                 # (Mq, dp)   query features ("pre", residual)
        sl = sl_ref[...]                 # (MK, cin)  [knn_feat | delta | 1 | qf_rep | pad]
        wf = wf_ref[...]                 # (cin, 3*dm) fused front-end weight

        wd2 = w_ref[0][:, :dm]           # (dm, dm)  fc_delta.2 (bias folded elsewhere)
        wg1 = w_ref[1][:, :dm]           # (dm, dm)  fc_gamma.0
        wg2 = w_ref[2][:, :dm]           # (dm, dm)  fc_gamma.2
        w2 = w_ref[3][:, :dp]            # (dm, dp)  fc2

        bg1 = b_ref[0:1, :dm]            # (1, dm)   = bg1 + bd2@wg1
        bg2 = b_ref[1:2, :dm]
        b2 = b_ref[2:3, :dp]

        # One MXU push: [ q - k | v + bd2 | fc_delta.0 pre-ReLU ]
        fused = jnp.dot(sl, wf, preferred_element_type=f32)          # (MK, 3*dm)
        a_qmk = fused[:, 0:dm]                                        # q - k
        v_b = fused[:, dm:2 * dm]                                     # v + bd2
        ph = jnp.maximum(fused[:, 2 * dm:3 * dm], 0.0)                # ReLU hidden

        pos0 = jnp.dot(ph, wd2, preferred_element_type=f32)           # pos_enc - bd2

        # attn = fc_gamma(q - k + pos_enc); bd2 folded into bg1'
        gin = a_qmk + pos0
        g = jnp.maximum(jnp.dot(gin, wg1, preferred_element_type=f32) + bg1, 0.0)
        a = jnp.dot(g, wg2, preferred_element_type=f32) + bg2         # (MK, dm)

        # softmax(attn / sqrt(d_model), dim=-2)  -> softmax over the K axis
        a3 = (a * inv_sqrt_dm).reshape(Mq, K, dm)
        a3 = a3 - jnp.max(a3, axis=1, keepdims=True)
        e = jnp.exp(a3)
        denom = jnp.sum(e, axis=1, keepdims=True)
        attn = e * pl.reciprocal(denom, approx=True)                  # EUP reciprocal

        # res = einsum('bmnf,bmnf->bmf', attn, v + pos_enc); res = fc2(res) + pre
        vp = (v_b + pos0).reshape(Mq, K, dm)                          # = v + pos_enc
        out = jnp.sum(attn * vp, axis=1)                              # (Mq, dm)
        res = jnp.dot(out, w2, preferred_element_type=f32) + b2 + qf  # (Mq, dp)

        res_ref[...] = res
        attn_ref[...] = attn.reshape(MK, dm)

    return kernel


# ----------------------------------------------------------------------------- params
def init_params(key, dp=D_POINTS, dm=D_MODEL):
    ks = jax.random.split(key, 15)
    w = lambda k, shape: jax.random.normal(k, shape, jnp.float32) * 0.1
    names_shapes = [
        ("wq", (dp, dm)), ("w1", (dp, dm)), ("b1", (1, dm)),
        ("wk", (dm, dm)), ("wv", (dm, dm)),
        ("wd1", (3, dm)), ("bd1", (1, dm)), ("wd2", (dm, dm)), ("bd2", (1, dm)),
        ("wg1", (dm, dm)), ("bg1", (1, dm)), ("wg2", (dm, dm)), ("bg2", (1, dm)),
        ("w2", (dm, dp)), ("b2", (1, dp)),
    ]
    return {n: w(k, s) for (n, s), k in zip(names_shapes, ks)}


def _cin(dp):
    raw = dp + 3 + 1 + dp                      # [knn_feat | delta | 1 | qf_rep]
    return ((raw + 7) // 8) * 8                # pad to sublane multiple


def _pack_weights(params, dp, dm):
    """Fold fc1 / w_qs / biases into one fused front-end weight + two small slabs."""
    f32 = jnp.float32
    cin = _cin(dp)

    wk_f = params["w1"] @ params["wk"]         # (dp, dm)
    wv_f = params["w1"] @ params["wv"]         # (dp, dm)
    bk_f = (params["b1"] @ params["wk"])[0]    # (dm,)
    bv_f = (params["b1"] @ params["wv"])[0]    # (dm,)

    wf = jnp.zeros((cin, 3 * dm), f32)
    # rows 0:dp  -> knn_feat
    wf = wf.at[0:dp, 0:dm].set(-wk_f)
    wf = wf.at[0:dp, dm:2 * dm].set(wv_f)
    # rows dp:dp+3 -> delta (query_xyz - knn_xyz)
    wf = wf.at[dp:dp + 3, 2 * dm:3 * dm].set(params["wd1"])
    # row dp+3 -> homogeneous 1.0 column: carries all the folded biases
    wf = wf.at[dp + 3, 0:dm].set(-bk_f)
    wf = wf.at[dp + 3, dm:2 * dm].set(bv_f + params["bd2"][0])   # bd2 folded into v
    wf = wf.at[dp + 3, 2 * dm:3 * dm].set(params["bd1"][0])
    # rows dp+4:dp+4+dp -> query_f (repeated per neighbor)  => q lands in the "q-k" block
    wf = wf.at[dp + 4:dp + 4 + dp, 0:dm].set(params["wq"])

    wcol = max(dm, dp)

    def pad_to(w, shape):
        out = jnp.zeros(shape, f32)
        return out.at[:w.shape[0], :w.shape[1]].set(w)

    w_slab = jnp.stack([
        pad_to(params["wd2"], (dm, wcol)),
        pad_to(params["wg1"], (dm, wcol)),
        pad_to(params["wg2"], (dm, wcol)),
        pad_to(params["w2"], (dm, wcol)),
    ])                                                           # (4, dm, wcol)

    bg1_f = params["bg1"] + params["bd2"] @ params["wg1"]        # bd2 folded into bg1
    b_slab = jnp.zeros((8, wcol), f32)
    b_slab = b_slab.at[0, :dm].set(bg1_f[0])
    b_slab = b_slab.at[1, :dm].set(params["bg2"][0])
    b_slab = b_slab.at[2, :dp].set(params["b2"][0])
    return wf, w_slab, b_slab


# ----------------------------------------------------------------------------- glue
def _knn_and_gather(xyz, features, query_xyz, k):
    # squared-distance KNN (matches pytorch3d.knn_points up to tie ordering)
    d2 = jnp.sum((query_xyz[:, :, None, :] - xyz[:, None, :, :]) ** 2, axis=-1)  # (B, M, N)
    _, knn_idx = jax.lax.top_k(-d2, k)                                           # (B, M, K)
    gather = jax.vmap(lambda src, idx: src[idx])
    knn_xyz = gather(xyz, knn_idx)          # (B, M, K, 3)
    knn_feat = gather(features, knn_idx)    # (B, M, K, dp)
    return knn_xyz, knn_feat


def _default_num_blocks():
    # v7x has 2 TensorCores per chip -> two parallel grid steps there;
    # v5e/v6e have one TC -> a single big block minimizes pipeline overhead.
    try:
        kind = jax.devices()[0].device_kind.lower()
    except Exception:
        return 1
    return 2 if "v7" in kind else 1


def point_transformer_cross_attn(params, xyz, features, query, k=K_NN, num_blocks=None):
    B, N, _ = xyz.shape
    M = query.shape[1]
    dp, dm = D_POINTS, D_MODEL
    BM = B * M
    cin = _cin(dp)

    query_xyz = query[:, :, :3]
    query_f = query[:, :, 3:]

    # TODO(synk): fuse the KNN top-k + gather into the Pallas pipeline (scalar-prefetched
    # knn_idx + manual DMA gather); at these sizes a per-row gather grid would cost more
    # in per-step overhead than the avoided HBM round-trip, so it stays in JAX glue.
    knn_xyz, knn_feat = _knn_and_gather(xyz, features, query_xyz, k)

    # Build the per-(query, neighbor) row slab: [knn_feat | delta | 1 | query_f | pad]
    delta = (query_xyz[:, :, None, :] - knn_xyz).reshape(BM * k, 3)
    kfeat = knn_feat.reshape(BM * k, dp)
    qf_rep = jnp.broadcast_to(query_f[:, :, None, :], (B, M, k, dp)).reshape(BM * k, dp)
    ones = jnp.ones((BM * k, 1), jnp.float32)
    pad = jnp.zeros((BM * k, cin - (2 * dp + 4)), jnp.float32)
    slab = jnp.concatenate([kfeat, delta, ones, qf_rep, pad], axis=1)   # (BM*k, cin)

    qf = query_f.reshape(BM, dp)
    wf, w_slab, b_slab = _pack_weights(params, dp, dm)

    if num_blocks is None:
        num_blocks = _default_num_blocks()
    G = max(int(num_blocks), 1)
    # block rows must be 8-aligned when the grid splits the row axis
    while G > 1 and (BM % G != 0 or (BM // G) % 8 != 0 or (BM // G * k) % 8 != 0):
        G -= 1
    Mq = BM // G

    kernel = _make_kernel(Mq, k, dp, dm)

    in_specs = [
        pl.BlockSpec((Mq, dp), lambda g: (g, 0)),               # query features (residual)
        pl.BlockSpec((Mq * k, cin), lambda g: (g, 0)),          # fused row slab
        pl.BlockSpec(wf.shape, lambda g: (0, 0)),               # fused weight (resident)
        pl.BlockSpec(w_slab.shape, lambda g: (0, 0, 0)),        # small weight slab (resident)
        pl.BlockSpec(b_slab.shape, lambda g: (0, 0)),           # bias slab (resident)
    ]
    out_specs = [
        pl.BlockSpec((Mq, dp), lambda g: (g, 0)),
        pl.BlockSpec((Mq * k, dm), lambda g: (g, 0)),
    ]
    out_shape = [
        jax.ShapeDtypeStruct((BM, dp), jnp.float32),
        jax.ShapeDtypeStruct((BM * k, dm), jnp.float32),
    ]

    res, attn = pl.pallas_call(
        kernel,
        grid=(G,),
        in_specs=in_specs,
        out_specs=out_specs,
        out_shape=out_shape,
        compiler_params=pltpu.CompilerParams(dimension_semantics=("parallel",)),
    )(qf, slab, wf, w_slab, b_slab)

    return res.reshape(B, M, dp), attn.reshape(B, M, k, dm)


# ----------------------------------------------------------------------------- reference
def reference(params, xyz, features, query, k=K_NN):
    """Pure-JAX reference mirroring the PyTorch _forward (uses the un-folded weights)."""
    query_xyz = query[:, :, :3]
    query_f = query[:, :, 3:]
    knn_xyz, knn_feat = _knn_and_gather(xyz, features, query_xyz, k)

    q = query_f @ params["wq"]
    x = knn_feat @ params["w1"] + params["b1"]
    kk = x @ params["wk"]
    vv = x @ params["wv"]
    delta = query_xyz[:, :, None, :] - knn_xyz
    pos = jnp.maximum(delta @ params["wd1"] + params["bd1"], 0.0) @ params["wd2"] + params["bd2"]
    g = (jnp.maximum((q[:, :, None, :] - kk + pos) @ params["wg1"] + params["bg1"], 0.0)
         @ params["wg2"] + params["bg2"])
    attn = jax.nn.softmax(g / np.sqrt(kk.shape[-1]), axis=-2)
    res = jnp.einsum("bmnf,bmnf->bmf", attn, vv + pos)
    res = res @ params["w2"] + params["b2"] + query_f
    return res, attn


if __name__ == "__main__":
    key = jax.random.PRNGKey(0)
    kp, kx, kf, kq = jax.random.split(key, 4)
    B, N, M = 2, 64, 16

    params = init_params(kp)
    xyz = jax.random.normal(kx, (B, N, 3), jnp.float32)
    features = jax.random.normal(kf, (B, N, D_POINTS), jnp.float32)
    query = jax.random.normal(kq, (B, M, 3 + D_POINTS), jnp.float32)

    fwd = jax.jit(point_transformer_cross_attn)
    res, attn = jax.block_until_ready(fwd(params, xyz, features, query))

    res_ref, attn_ref = reference(params, xyz, features, query)
    assert res.shape == (B, M, D_POINTS) and attn.shape == (B, M, K_NN, D_MODEL)
    # tolerances account for the EUP approximate reciprocal in the softmax denominator
    # and the algebraic weight folding (different fp accumulation order)
    assert jnp.allclose(res, res_ref, atol=2e-3, rtol=2e-3), "res mismatch"
    assert jnp.allclose(attn, attn_ref, atol=1e-3, rtol=1e-2), "attn mismatch"
    print("KERNEL_OK")
</pallas_src>

<mosaic_0001>
module attributes {stable_mosaic.version = 11 : i64} {
  func.func @kernel(%arg0: i32, %arg1: memref<32x32xf32, #tpu.memory_space<vmem>>, %arg2: memref<256x72xf32, #tpu.memory_space<vmem>>, %arg3: memref<72x96xf32, #tpu.memory_space<vmem>>, %arg4: memref<4x32x32xf32, #tpu.memory_space<vmem>>, %arg5: memref<8x32xf32, #tpu.memory_space<vmem>>, %arg6: memref<32x32xf32, #tpu.memory_space<vmem>>, %arg7: memref<256x32xf32, #tpu.memory_space<vmem>>) attributes {dimension_semantics = [#tpu.dimension_semantics<parallel>], iteration_bounds = array<i64: 1>, scalar_prefetch = 0 : i64, scratch_operands = 0 : i64, tpu.core_type = #tpu.core_type<tc>, window_params = [{transform_indices = @transform_0, window_bounds = array<i64: 32, 32>}, {transform_indices = @transform_1, window_bounds = array<i64: 256, 72>}, {pipeline_mode = #tpu.pipeline_mode<synchronous>, transform_indices = @transform_2, window_bounds = array<i64: 72, 96>}, {pipeline_mode = #tpu.pipeline_mode<synchronous>, transform_indices = @transform_3, window_bounds = array<i64: 4, 32, 32>}, {pipeline_mode = #tpu.pipeline_mode<synchronous>, transform_indices = @transform_4, window_bounds = array<i64: 8, 32>}, {transform_indices = @transform_5, window_bounds = array<i64: 32, 32>}, {transform_indices = @transform_6, window_bounds = array<i64: 256, 32>}]} {
    %c0 = arith.constant 0 : index
    %c0_0 = arith.constant 0 : index
    %0 = vector.load %arg1[%c0, %c0_0] : memref<32x32xf32, #tpu.memory_space<vmem>>, vector<32x32xf32>
    %c0_1 = arith.constant 0 : index
    %c0_2 = arith.constant 0 : index
    %1 = vector.load %arg2[%c0_1, %c0_2] : memref<256x72xf32, #tpu.memory_space<vmem>>, vector<256x72xf32>
    %c0_3 = arith.constant 0 : index
    %c0_4 = arith.constant 0 : index
    %2 = vector.load %arg3[%c0_3, %c0_4] : memref<72x96xf32, #tpu.memory_space<vmem>>, vector<72x96xf32>
    %c0_5 = arith.constant 0 : index
    %c0_6 = arith.constant 0 : index
    %c0_7 = arith.constant 0 : index
    %3 = vector.load %arg4[%c0_5, %c0_6, %c0_7] : memref<4x32x32xf32, #tpu.memory_space<vmem>>, vector<1x32x32xf32>
    %4 = vector.shape_cast %3 : vector<1x32x32xf32> to vector<32x32xf32>
    %c1 = arith.constant 1 : index
    %c0_8 = arith.constant 0 : index
    %c0_9 = arith.constant 0 : index
    %5 = vector.load %arg4[%c1, %c0_8, %c0_9] : memref<4x32x32xf32, #tpu.memory_space<vmem>>, vector<1x32x32xf32>
    %6 = vector.shape_cast %5 : vector<1x32x32xf32> to vector<32x32xf32>
    %c2 = arith.constant 2 : index
    %c0_10 = arith.constant 0 : index
    %c0_11 = arith.constant 0 : index
    %7 = vector.load %arg4[%c2, %c0_10, %c0_11] : memref<4x32x32xf32, #tpu.memory_space<vmem>>, vector<1x32x32xf32>
    %8 = vector.shape_cast %7 : vector<1x32x32xf32> to vector<32x32xf32>
    %c3 = arith.constant 3 : index
    %c0_12 = arith.constant 0 : index
    %c0_13 = arith.constant 0 : index
    %9 = vector.load %arg4[%c3, %c0_12, %c0_13] : memref<4x32x32xf32, #tpu.memory_space<vmem>>, vector<1x32x32xf32>
    %10 = vector.shape_cast %9 : vector<1x32x32xf32> to vector<32x32xf32>
    %c0_14 = arith.constant 0 : index
    %c0_15 = arith.constant 0 : index
    %11 = vector.load %arg5[%c0_14, %c0_15] : memref<8x32xf32, #tpu.memory_space<vmem>>, vector<1x32xf32>
    %c1_16 = arith.constant 1 : index
    %c0_17 = arith.constant 0 : index
    %12 = vector.load %arg5[%c1_16, %c0_17] : memref<8x32xf32, #tpu.memory_space<vmem>>, vector<1x32xf32>
    %c2_18 = arith.constant 2 : index
    %c0_19 = arith.constant 0 : index
    %13 = vector.load %arg5[%c2_18, %c0_19] : memref<8x32xf32, #tpu.memory_space<vmem>>, vector<1x32xf32>
    %cst = arith.constant dense<0.000000e+00> : vector<256x96xf32>
    %14 = tpu.matmul %1, %2, %cst {dimension_numbers = #tpu.dot_dimension_numbers<[1], [0], [0], [1], [0, 0, 1, 1], [], []>} : vector<256x72xf32>, vector<72x96xf32>, vector<256x96xf32> -> vector<256x96xf32>
    %15 = vector.extract_strided_slice %14 {offsets = [0, 0], sizes = [256, 32], strides = [1, 1]} : vector<256x96xf32> to vector<256x32xf32>
    %16 = vector.extract_strided_slice %14 {offsets = [0, 32], sizes = [256, 32], strides = [1, 1]} : vector<256x96xf32> to vector<256x32xf32>
    %17 = vector.extract_strided_slice %14 {offsets = [0, 64], sizes = [256, 32], strides = [1, 1]} : vector<256x96xf32> to vector<256x32xf32>
    %cst_20 = arith.constant 0.000000e+00 : f32
    %18 = vector.broadcast %cst_20 : f32 to vector<256x32xf32>
    %19 = arith.maximumf %17, %18 : vector<256x32xf32>
    %cst_21 = arith.constant dense<0.000000e+00> : vector<256x32xf32>
    %20 = tpu.matmul %19, %4, %cst_21 {dimension_numbers = #tpu.dot_dimension_numbers<[1], [0], [0], [1], [0, 0, 1, 1], [], []>} : vector<256x32xf32>, vector<32x32xf32>, vector<256x32xf32> -> vector<256x32xf32>
    %21 = arith.addf %15, %20 : vector<256x32xf32>
    %cst_22 = arith.constant dense<0.000000e+00> : vector<256x32xf32>
    %22 = tpu.matmul %21, %6, %cst_22 {dimension_numbers = #tpu.dot_dimension_numbers<[1], [0], [0], [1], [0, 0, 1, 1], [], []>} : vector<256x32xf32>, vector<32x32xf32>, vector<256x32xf32> -> vector<256x32xf32>
    %23 = vector.broadcast %11 : vector<1x32xf32> to vector<256x32xf32>
    %24 = arith.addf %22, %23 : vector<256x32xf32>
    %cst_23 = arith.constant 0.000000e+00 : f32
    %25 = vector.broadcast %cst_23 : f32 to vector<256x32xf32>
    %26 = arith.maximumf %24, %25 : vector<256x32xf32>
    %cst_24 = arith.constant dense<0.000000e+00> : vector<256x32xf32>
    %27 = tpu.matmul %26, %8, %cst_24 {dimension_numbers = #tpu.dot_dimension_numbers<[1], [0], [0], [1], [0, 0, 1, 1], [], []>} : vector<256x32xf32>, vector<32x32xf32>, vector<256x32xf32> -> vector<256x32xf32>
    %28 = vector.broadcast %12 : vector<1x32xf32> to vector<256x32xf32>
    %29 = arith.addf %27, %28 : vector<256x32xf32>
    %cst_25 = arith.constant 0.176776692 : f32
    %30 = vector.broadcast %cst_25 : f32 to vector<256x32xf32>
    %31 = arith.mulf %29, %30 : vector<256x32xf32>
    %32 = vector.shape_cast %31 : vector<256x32xf32> to vector<32x8x32xf32>
    %cst_26 = arith.constant dense<0xFF800000> : vector<32x32xf32>
    %33 = vector.multi_reduction <maximumf>, %32, %cst_26 [1] : vector<32x8x32xf32> to vector<32x32xf32>
    %34 = vector.shape_cast %33 : vector<32x32xf32> to vector<32x1x32xf32>
    %35 = vector.broadcast %34 : vector<32x1x32xf32> to vector<32x8x32xf32>
    %36 = arith.subf %32, %35 : vector<32x8x32xf32>
    %37 = math.exp %36 : vector<32x8x32xf32>
    %cst_27 = arith.constant dense<0.000000e+00> : vector<32x32xf32>
    %38 = vector.multi_reduction <add>, %37, %cst_27 [1] : vector<32x8x32xf32> to vector<32x32xf32>
    %39 = vector.shape_cast %38 : vector<32x32xf32> to vector<32x1x32xf32>
    %40 = tpu.reciprocal %39 {approx = true} : vector<32x1x32xf32> -> vector<32x1x32xf32>
    %41 = vector.broadcast %40 : vector<32x1x32xf32> to vector<32x8x32xf32>
    %42 = arith.mulf %37, %41 : vector<32x8x32xf32>
    %43 = arith.addf %16, %20 : vector<256x32xf32>
    %44 = vector.shape_cast %43 : vector<256x32xf32> to vector<32x8x32xf32>
    %45 = arith.mulf %42, %44 : vector<32x8x32xf32>
    %cst_28 = arith.constant dense<0.000000e+00> : vector<32x32xf32>
    %46 = vector.multi_reduction <add>, %45, %cst_28 [1] : vector<32x8x32xf32> to vector<32x32xf32>
    %cst_29 = arith.constant dense<0.000000e+00> : vector<32x32xf32>
    %47 = tpu.matmul %46, %10, %cst_29 {dimension_numbers = #tpu.dot_dimension_numbers<[1], [0], [0], [1], [0, 0, 1, 1], [], []>} : vector<32x32xf32>, vector<32x32xf32>, vector<32x32xf32> -> vector<32x32xf32>
    %48 = vector.broadcast %13 : vector<1x32xf32> to vector<32x32xf32>
    %49 = arith.addf %47, %48 : vector<32x32xf32>
    %50 = arith.addf %49, %0 : vector<32x32xf32>
    %c0_30 = arith.constant 0 : index
    %c0_31 = arith.constant 0 : index
    %51 = vector.load %arg6[%c0_30, %c0_31] : memref<32x32xf32, #tpu.memory_space<vmem>>, vector<32x32xf32>
    tpu.vector_store %arg6[%c0_30, %c0_31], %50 {strides = array<i32>} : memref<32x32xf32, #tpu.memory_space<vmem>>, vector<32x32xf32>,
    %52 = vector.shape_cast %42 : vector<32x8x32xf32> to vector<256x32xf32>
    %c0_32 = arith.constant 0 : index
    %c0_33 = arith.constant 0 : index
    %53 = vector.load %arg7[%c0_32, %c0_33] : memref<256x32xf32, #tpu.memory_space<vmem>>, vector<256x32xf32>
    tpu.vector_store %arg7[%c0_32, %c0_33], %52 {strides = array<i32>} : memref<256x32xf32, #tpu.memory_space<vmem>>, vector<256x32xf32>,
    return
  }
  func.func @transform_0(%arg0: i32) -> (i32, i32) {
    %c0_i32 = arith.constant 0 : i32
    %c0_i32_0 = arith.constant 0 : i32
    return %arg0, %c0_i32 : i32, i32
  }
  func.func @transform_1(%arg0: i32) -> (i32, i32) {
    %c0_i32 = arith.constant 0 : i32
    %c0_i32_0 = arith.constant 0 : i32
    return %arg0, %c0_i32 : i32, i32
  }
  func.func @transform_2(%arg0: i32) -> (i32, i32) {
    %c0_i32 = arith.constant 0 : i32
    %c0_i32_0 = arith.constant 0 : i32
    %c0_i32_1 = arith.constant 0 : i32
    return %c0_i32, %c0_i32_0 : i32, i32
  }
  func.func @transform_3(%arg0: i32) -> (i32, i32, i32) {
    %c0_i32 = arith.constant 0 : i32
    %c0_i32_0 = arith.constant 0 : i32
    %c0_i32_1 = arith.constant 0 : i32
    %c0_i32_2 = arith.constant 0 : i32
    return %c0_i32, %c0_i32_0, %c0_i32_1 : i32, i32, i32
  }
  func.func @transform_4(%arg0: i32) -> (i32, i32) {
    %c0_i32 = arith.constant 0 : i32
    %c0_i32_0 = arith.constant 0 : i32
    %c0_i32_1 = arith.constant 0 : i32
    return %c0_i32, %c0_i32_0 : i32, i32
  }
  func.func @transform_5(%arg0: i32) -> (i32, i32) {
    %c0_i32 = arith.constant 0 : i32
    %c0_i32_0 = arith.constant 0 : i32
    return %arg0, %c0_i32 : i32, i32
  }
  func.func @transform_6(%arg0: i32) -> (i32, i32) {
    %c0_i32 = arith.constant 0 : i32
    %c0_i32_0 = arith.constant 0 : i32
    return %arg0, %c0_i32 : i32, i32
  }
}

</mosaic_0001>

<llo_original>
// kernel: neg.3
$region0: #{neg.3}
  #allocation0 [shape = 's32[1]{0}', space=sflag, size = 0x4, scoped, tag = 'scoped memory for neg.3']
  %s0 = inlined_call_operand.vmem [shape: f32[2,16,64], index: 0, kind: input, shape index: {}]
  %s1 = inlined_call_operand.vmem [shape: f32[2,16,64], index: 1, kind: output, shape index: {}]
  %v2 = vld [vmem:[%s0] sm:$0xff]
  %3 = xla_tuple %v2
  %4 = xla_tuple %3
  %v5 = vxor.u32 %v2, 2147483648
  %6 = xla_tuple %v5
  %7 = vst [vmem:[%s1] sm:$0xff] %v5
  %s8 = scalar_lea.vmem %s0, 16
  %v9 = vld [vmem:[%s8] sm:$0xff]
  %10 = xla_tuple %v9
  %11 = xla_tuple %10
  %v12 = vxor.u32 %v9, 2147483648
  %13 = xla_tuple %v12
  %s14 = scalar_lea.vmem %s1, 16
  %15 = vst [vmem:[%s14] sm:$0xff] %v12
  %s16 = scalar_lea.vmem %s0, 8
  %v17 = vld [vmem:[%s16] sm:$0xff]
  %18 = xla_tuple %v17
  %19 = xla_tuple %18
  %v20 = vxor.u32 %v17, 2147483648
  %21 = xla_tuple %v20
  %s22 = scalar_lea.vmem %s1, 8
  %23 = vst [vmem:[%s22] sm:$0xff] %v20
  %s24 = scalar_lea.vmem %s0, 24
  %v25 = vld [vmem:[%s24] sm:$0xff]
  %26 = xla_tuple %v25
  %27 = xla_tuple %26
  %v28 = vxor.u32 %v25, 2147483648
  %29 = xla_tuple %v28
  %s30 = scalar_lea.vmem %s1, 24
  %31 = vst [vmem:[%s30] sm:$0xff] %v28

// kernel: point_transformer_cross_attn.1
$region0: #{point_transformer_cross_attn.1}
  #allocation0 [shape = 'u32[]', space=smem, size = 0x4, offset = 0x4, fixed_abs, tag = 'smem constant byte address 0x4 - core index']
  #allocation1 [shape = 'u32[144,128]{1,0:T(1,128)}', space=vmem, size = 0x12000, scoped, tag = 'internal scratch']
  %s0 = inlined_call_operand.vmem [shape: f32[32,32], index: 0, kind: input, shape index: {}]
  %s1 = inlined_call_operand.vmem [shape: f32[256,72], index: 1, kind: input, shape index: {}]
  %s2 = inlined_call_operand.vmem [shape: f32[72,96], index: 2, kind: input, shape index: {}]
  %s3 = inlined_call_operand.vmem [shape: f32[4,32,32], index: 3, kind: input, shape index: {}]
  %s4 = inlined_call_operand.vmem [shape: f32[8,32], index: 4, kind: input, shape index: {}]
  %s5 = inlined_call_operand.hbm [shape: f32[32,32], index: 5, kind: output, shape index: {0}]
  %s6 = inlined_call_operand.hbm [shape: f32[256,32], index: 6, kind: output, shape index: {1}]
  %7 = xla_tuple %s5, %s6
  %s8 = sld [smem:[#allocation0]]
  $region38: #{point_transformer_cross_attn.1} parent=0
    _
  %s10 = ssub.s32 1, %s8
  %s11 = scalar_select 0, %s10, %s8
  $region1: #{point_transformer_cross_attn.1} parent=0
    #allocation2 [shape = 'u8[16384]{0}', space=vmem, size = 0x4000, scoped, tag = 'output window, operand 0, single buffered']
    #allocation3 [shape = 's32[1]{0}', space=sflag, size = 0x4, scoped, tag = 'scoped memory for point_transformer_cross_attn.1']
    #allocation4 [shape = 'u8[131072]{0}', space=vmem, size = 0x20000, scoped, tag = 'output window, operand 1, single buffered']
    #allocation5 [shape = 's32[1]{0}', space=sflag, size = 0x4, scoped, tag = 'scoped memory for point_transformer_cross_attn.1']
    %12 = vsyncpa [#allocation3], 0
    %13 = vsyncpa [#allocation5], 0
    // Predicated region
    $region2: #{point_transformer_cross_attn.1} parent=1 // pred_check
      _
    $region3: #{point_transformer_cross_attn.1} parent=1 // pred_check_branch
      %15 = sbr.rel (0) target = $region5
    $region4: #{point_transformer_cross_attn.1} parent=1 // pred_region
      _
    $region5: #{point_transformer_cross_attn.1} parent=1 // pred_fallthru
      _
    // Predicated region
    $region6: #{point_transformer_cross_attn.1} parent=1 // pred_check
      _
    $region7: #{point_transformer_cross_attn.1} parent=1 // pred_check_branch
      %17 = sbr.rel (0) target = $region9
    $region8: #{point_transformer_cross_attn.1} parent=1 // pred_region
      _
    $region9: #{point_transformer_cross_attn.1} parent=1 // pred_fallthru
      _
    // Predicated region
    $region10: #{point_transformer_cross_attn.1} parent=1 // pred_check
      _
    $region11: #{point_transformer_cross_attn.1} parent=1 // pred_check_branch
      %19 = sbr.rel (0) target = $region13
    $region12: #{point_transformer_cross_attn.1} parent=1 // pred_region
      _
    $region13: #{point_transformer_cross_attn.1} parent=1 // pred_fallthru
      _
    // Predicated region
    $region14: #{point_transformer_cross_attn.1} parent=1 // pred_check
      _
    $region15: #{point_transformer_cross_attn.1} parent=1 // pred_check_branch
      %21 = sbr.rel (0) target = $region17
    $region16: #{point_transformer_cross_attn.1} parent=1 // pred_region
      _
    $region17: #{point_transformer_cross_attn.1} parent=1 // pred_fallthru
      _
    // Predicated region
    $region18: #{point_transformer_cross_attn.1} parent=1 // pred_check
      _
    $region19: #{point_transformer_cross_attn.1} parent=1 // pred_check_branch
      %23 = sbr.rel (0) target = $region21
    $region20: #{point_transformer_cross_attn.1} parent=1 // pred_region
      _
    $region21: #{point_transformer_cross_attn.1} parent=1 // pred_fallthru
      _
    %v24 = vld [vmem:[%s0] sm:$0xff]
    %v25 = vld [vmem:[%s0 + $0x8] sm:$0xff]
    %v26 = vld [vmem:[%s0 + $0x10] sm:$0xff]
    %v27 = vld [vmem:[%s0 + $0x18] sm:$0xff]
    %v28 = vld [vmem:[%s1] sm:$0xff]
    %v29 = vld [vmem:[%s1 + $0x8] sm:$0xff]
    %v30 = vld [vmem:[%s1 + $0x10] sm:$0xff]
    %v31 = vld [vmem:[%s1 + $0x18] sm:$0xff]
    %v32 = vld [vmem:[%s1 + $0x20] sm:$0xff]
    %v33 = vld [vmem:[%s1 + $0x28] sm:$0xff]
    %v34 = vld [vmem:[%s1 + $0x30] sm:$0xff]
    %v35 = vld [vmem:[%s1 + $0x38] sm:$0xff]
    %v36 = vld [vmem:[%s1 + $0x40] sm:$0xff]
    %v37 = vld [vmem:[%s1 + $0x48] sm:$0xff]
    %v38 = vld [vmem:[%s1 + $0x50] sm:$0xff]
    %v39 = vld [vmem:[%s1 + $0x58] sm:$0xff]
    %v40 = vld [vmem:[%s1 + $0x60] sm:$0xff]
    %v41 = vld [vmem:[%s1 + $0x68] sm:$0xff]
    %v42 = vld [vmem:[%s1 + $0x70] sm:$0xff]
    %v43 = vld [vmem:[%s1 + $0x78] sm:$0xff]
    %v44 = vld [vmem:[%s1 + $0x80] sm:$0xff]
    %v45 = vld [vmem:[%s1 + $0x88] sm:$0xff]
    %v46 = vld [vmem:[%s1 + $0x90] sm:$0xff]
    %v47 = vld [vmem:[%s1 + $0x98] sm:$0xff]
    %v48 = vld [vmem:[%s1 + $0xa0] sm:$0xff]
    %v49 = vld [vmem:[%s1 + $0xa8] sm:$0xff]
    %v50 = vld [vmem:[%s1 + $0xb0] sm:$0xff]
    %v51 = vld [vmem:[%s1 + $0xb8] sm:$0xff]
    %v52 = vld [vmem:[%s1 + $0xc0] sm:$0xff]
    %v53 = vld [vmem:[%s1 + $0xc8] sm:$0xff]
    %v54 = vld [vmem:[%s1 + $0xd0] sm:$0xff]
    %v55 = vld [vmem:[%s1 + $0xd8] sm:$0xff]
    %v56 = vld [vmem:[%s1 + $0xe0] sm:$0xff]
    %v57 = vld [vmem:[%s1 + $0xe8] sm:$0xff]
    %v58 = vld [vmem:[%s1 + $0xf0] sm:$0xff]
    %v59 = vld [vmem:[%s1 + $0xf8] sm:$0xff]
    %v60 = vld [vmem:[%s2] sm:$0xff]
    %v61 = vld [vmem:[%s2 + $0x8] sm:$0xff]
    %v62 = vld [vmem:[%s2 + $0x10] sm:$0xff]
    %v63 = vld [vmem:[%s2 + $0x18] sm:$0xff]
    %v64 = vld [vmem:[%s2 + $0x20] sm:$0xff]
    %v65 = vld [vmem:[%s2 + $0x28] sm:$0xff]
    %v66 = vld [vmem:[%s2 + $0x30] sm:$0xff]
    %v67 = vld [vmem:[%s2 + $0x38] sm:$0xff]
    %v68 = vld [vmem:[%s2 + $0x40] sm:$0xff]
    %v69 = vld [vmem:[%s3] sm:$0xff]
    %v70 = vld [vmem:[%s3 + $0x8] sm:$0xff]
    %v71 = vld [vmem:[%s3 + $0x10] sm:$0xff]
    %v72 = vld [vmem:[%s3 + $0x18] sm:$0xff]
    %s73 = scalar_lea.vmem %s3, 32
    %v74 = vld [vmem:[%s73] sm:$0xff]
    %v75 = vld [vmem:[%s73 + $0x8] sm:$0xff]
    %v76 = vld [vmem:[%s73 + $0x10] sm:$0xff]
    %v77 = vld [vmem:[%s73 + $0x18] sm:$0xff]
    %s78 = scalar_lea.vmem %s3, 64
    %v79 = vld [vmem:[%s78] sm:$0xff]
    %v80 = vld [vmem:[%s78 + $0x8] sm:$0xff]
    %v81 = vld [vmem:[%s78 + $0x10] sm:$0xff]
    %v82 = vld [vmem:[%s78 + $0x18] sm:$0xff]
    %s83 = scalar_lea.vmem %s3, 96
    %v84 = vld [vmem:[%s83] sm:$0xff]
    %v85 = vld [vmem:[%s83 + $0x8] sm:$0xff]
    %v86 = vld [vmem:[%s83 + $0x10] sm:$0xff]
    %v87 = vld [vmem:[%s83 + $0x18] sm:$0xff]
    %v88 = vld [vmem:[%s4] sm:$0x1]
    %v89 = vld [vmem:[%s4 + $0x1] sm:$0x1]
    %v90 = vld [vmem:[%s4 + $0x2] sm:$0x1]
    %vm91 = vcmask 588800
    %v93 = vsel %vm91, %v28, 0
    %v96 = vsel %vm91, %v29, 0
    %v99 = vsel %vm91, %v30, 0
    %v102 = vsel %vm91, %v31, 0
    %v105 = vsel %vm91, %v32, 0
    %v108 = vsel %vm91, %v33, 0
    %v111 = vsel %vm91, %v34, 0
    %v114 = vsel %vm91, %v35, 0
    %v117 = vsel %vm91, %v36, 0
    %v120 = vsel %vm91, %v37, 0
    %v123 = vsel %vm91, %v38, 0
    %v126 = vsel %vm91, %v39, 0
    %v129 = vsel %vm91, %v40, 0
    %v132 = vsel %vm91, %v41, 0
    %v135 = vsel %vm91, %v42, 0
    %v138 = vsel %vm91, %v43, 0
    %v141 = vsel %vm91, %v44, 0
    %v144 = vsel %vm91, %v45, 0
    %v147 = vsel %vm91, %v46, 0
    %v150 = vsel %vm91, %v47, 0
    %v153 = vsel %vm91, %v48, 0
    %v156 = vsel %vm91, %v49, 0
    %v159 = vsel %vm91, %v50, 0
    %v162 = vsel %vm91, %v51, 0
    %v165 = vsel %vm91, %v52, 0
    %v168 = vsel %vm91, %v53, 0
    %v171 = vsel %vm91, %v54, 0
    %v174 = vsel %vm91, %v55, 0
    %v177 = vsel %vm91, %v56, 0
    %v180 = vsel %vm91, %v57, 0
    %v183 = vsel %vm91, %v58, 0
    %v186 = vsel %vm91, %v59, 0
    %188 = vmatprep.subr.mxu0 0.0
    %189 = vmatpush1.msra.mxu0 %v60
    %190 = vmatprep.subr.mxu0 0.0
    %191 = vmatpush1.msra.mxu0 %v61
    %192 = vmatprep.subr.mxu0 0.0
    %193 = vmatpush1.msra.mxu0 %v62
    %194 = vmatprep.subr.mxu0 0.0
    %195 = vmatpush1.msra.mxu0 %v63
    %196 = vmatprep.subr.mxu0 0.0
    %197 = vmatpush1.msra.mxu0 %v64
    %198 = vmatprep.subr.mxu0 0.0
    %199 = vmatpush1.msra.mxu0 %v65
    %200 = vmatprep.subr.mxu0 0.0
    %201 = vmatpush1.msra.mxu0 %v66
    %202 = vmatprep.subr.mxu0 0.0
    %203 = vmatpush1.msra.mxu0 %v67
    %204 = vmatprep.subr.mxu0 0.0
    %205 = vmatpush1.msra.mxu0 %v68
    %206 = vmatprep.subr.mxu0 0.0
    %207 = vmatpush1.msra.mxu0 0.0
    %208 = vmatprep.subr.mxu0 0.0
    %209 = vmatpush1.msra.mxu0 0.0
    %210 = vmatprep.subr.mxu0 0.0
    %211 = vmatpush1.msra.mxu0 0.0
    %212 = vmatprep.subr.mxu0 0.0
    %213 = vmatpush1.msra.mxu0 0.0
    %214 = vmatprep.subr.mxu0 0.0
    %215 = vmatpush1.msra.mxu0 0.0
    %216 = vmatprep.subr.mxu0 0.0
    %217 = vmatpush1.msra.mxu0 0.0
    %218 = vmatprep.subr.mxu0 0.0
    %219 = vmatpush1.msra.mxu0 0.0
    %220 = vmatprep.subr.mxu0 0.0
    %221 = vmatpush1.msra.mxu0 0.0
    %222 = vmatprep.subr.mxu0 0.0
    %223 = vmatpush1.msra.mxu0 0.0
    %224 = vmatprep.subr.mxu0 0.0
    %225 = vmatpush1.msra.mxu0 0.0
    %226 = vmatprep.subr.mxu0 0.0
    %227 = vmatpush1.msra.mxu0 0.0
    %228 = vmatprep.subr.mxu0 0.0
    %229 = vmatpush1.msra.mxu0 0.0
    %230 = vmatprep.subr.mxu0 0.0
    %231 = vmatpush1.msra.mxu0 0.0
    %232 = vmatprep.subr.mxu0 0.0
    %233 = vmatpush1.msra.mxu0 0.0
    %234 = vmatprep.subr.mxu0 0.0
    %235 = vmatpush1.msra.mxu0 0.0
    %236 = vmatprep.subr.mxu0 0.0
    %237 = vmatpush1.msra.mxu0 0.0
    %238 = vmatprep.subr.mxu0 0.0
    %239 = vmatpush1.msra.mxu0 0.0
    %240 = vmatprep.subr.mxu0 0.0
    %241 = vmatpush1.msra.mxu0 0.0
    %242 = vmatprep.subr.mxu0 0.0
    %243 = vmatpush1.msra.mxu0 0.0
    %244 = vmatprep.subr.mxu0 0.0
    %245 = vmatpush1.msra.mxu0 0.0
    %246 = vmatprep.subr.mxu0 0.0
    %247 = vmatpush1.msra.mxu0 0.0
    %248 = vmatprep.subr.mxu0 0.0
    %249 = vmatpush1.msra.mxu0 0.0
    %250 = vmatprep.subr.mxu0 0.0
    %251 = vmatpush1.msra.mxu0 0.0
    %252 = vmatprep.mubr.f32.mxu0 0.0
    %253 = vmatmul.mubr.f32.gmra.mrb[0].mxu0 %v93
    %v254 = vpop.f32.mrb[0].mxu0
    %v255 = vadd.f32 0.0, %v254
    %v256 = vpop.f32.mrb[0].mxu0
    %257 = vmatprep.mubr.f32.mxu0 0.0
    %258 = vmatmul.mubr.f32.gmra.mrb[0].mxu0 %v96
    %v259 = vpop.f32.mrb[0].mxu0
    %v260 = vadd.f32 0.0, %v259
    %v261 = vpop.f32.mrb[0].mxu0
    %262 = vmatprep.mubr.f32.mxu0 0.0
    %263 = vmatmul.mubr.f32.gmra.mrb[0].mxu0 %v99
    %v264 = vpop.f32.mrb[0].mxu0
    %v265 = vadd.f32 0.0, %v264
    %v266 = vpop.f32.mrb[0].mxu0
    %267 = vmatprep.mubr.f32.mxu0 0.0
    %268 = vmatmul.mubr.f32.gmra.mrb[0].mxu0 %v102
    %v269 = vpop.f32.mrb[0].mxu0
    %v270 = vadd.f32 0.0, %v269
    %v271 = vpop.f32.mrb[0].mxu0
    %272 = vmatprep.mubr.f32.mxu0 0.0
    %273 = vmatmul.mubr.f32.gmra.mrb[0].mxu0 %v105
    %v274 = vpop.f32.mrb[0].mxu0
    %v275 = vadd.f32 0.0, %v274
    %v276 = vpop.f32.mrb[0].mxu0
    %277 = vmatprep.mubr.f32.mxu0 0.0
    %278 = vmatmul.mubr.f32.gmra.mrb[0].mxu0 %v108
    %v279 = vpop.f32.mrb[0].mxu0
    %v280 = vadd.f32 0.0, %v279
    %v281 = vpop.f32.mrb[0].mxu0
    %282 = vmatprep.mubr.f32.mxu0 0.0
    %283 = vmatmul.mubr.f32.gmra.mrb[0].mxu0 %v111
    %v284 = vpop.f32.mrb[0].mxu0
    %v285 = vadd.f32 0.0, %v284
    %v286 = vpop.f32.mrb[0].mxu0
    %287 = vmatprep.mubr.f32.mxu0 0.0
    %288 = vmatmul.mubr.f32.gmra.mrb[0].mxu0 %v114
    %v289 = vpop.f32.mrb[0].mxu0
    %v290 = vadd.f32 0.0, %v289
    %v291 = vpop.f32.mrb[0].mxu0
    %292 = vmatprep.mubr.f32.mxu0 0.0
    %293 = vmatmul.mubr.f32.gmra.mrb[0].mxu0 %v117
    %v294 = vpop.f32.mrb[0].mxu0
    %v295 = vadd.f32 0.0, %v294
    %v296 = vpop.f32.mrb[0].mxu0
    %297 = vmatprep.mubr.f32.mxu0 0.0
    %298 = vmatmul.mubr.f32.gmra.mrb[0].mxu0 %v120
    %v299 = vpop.f32.mrb[0].mxu0
    %v300 = vadd.f32 0.0, %v299
    %v301 = vpop.f32.mrb[0].mxu0
    %302 = vmatprep.mubr.f32.mxu0 0.0
    %303 = vmatmul.mubr.f32.gmra.mrb[0].mxu0 %v123
    %v304 = vpop.f32.mrb[0].mxu0
    %v305 = vadd.f32 0.0, %v304
    %v306 = vpop.f32.mrb[0].mxu0
    %307 = vmatprep.mubr.f32.mxu0 0.0
    %308 = vmatmul.mubr.f32.gmra.mrb[0].mxu0 %v126
    %v309 = vpop.f32.mrb[0].mxu0
    %v310 = vadd.f32 0.0, %v309
    %v311 = vpop.f32.mrb[0].mxu0
    %312 = vmatprep.mubr.f32.mxu0 0.0
    %313 = vmatmul.mubr.f32.gmra.mrb[0].mxu0 %v129
    %v314 = vpop.f32.mrb[0].mxu0
    %v315 = vadd.f32 0.0, %v314
    %v316 = vpop.f32.mrb[0].mxu0
    %317 = vmatprep.mubr.f32.mxu0 0.0
    %318 = vmatmul.mubr.f32.gmra.mrb[0].mxu0 %v132
    %v319 = vpop.f32.mrb[0].mxu0
    %v320 = vadd.f32 0.0, %v319
    %v321 = vpop.f32.mrb[0].mxu0
    %322 = vmatprep.mubr.f32.mxu0 0.0
    %323 = vmatmul.mubr.f32.gmra.mrb[0].mxu0 %v135
    %v324 = vpop.f32.mrb[0].mxu0
    %v325 = vadd.f32 0.0, %v324
    %v326 = vpop.f32.mrb[0].mxu0
    %327 = vmatprep.mubr.f32.mxu0 0.0
    %328 = vmatmul.mubr.f32.gmra.mrb[0].mxu0 %v138
    %v329 = vpop.f32.mrb[0].mxu0
    %v330 = vadd.f32 0.0, %v329
    %v331 = vpop.f32.mrb[0].mxu0
    %332 = vmatprep.mubr.f32.mxu0 0.0
    %333 = vmatmul.mubr.f32.gmra.mrb[0].mxu0 %v141
    %v334 = vpop.f32.mrb[0].mxu0
    %v335 = vadd.f32 0.0, %v334
    %v336 = vpop.f32.mrb[0].mxu0
    %337 = vmatprep.mubr.f32.mxu0 0.0
    %338 = vmatmul.mubr.f32.gmra.mrb[0].mxu0 %v144
    %v339 = vpop.f32.mrb[0].mxu0
    %v340 = vadd.f32 0.0, %v339
    %v341 = vpop.f32.mrb[0].mxu0
    %342 = vmatprep.mubr.f32.mxu0 0.0
    %343 = vmatmul.mubr.f32.gmra.mrb[0].mxu0 %v147
    %v344 = vpop.f32.mrb[0].mxu0
    %v345 = vadd.f32 0.0, %v344
    %v346 = vpop.f32.mrb[0].mxu0
    %347 = vmatprep.mubr.f32.mxu0 0.0
    %348 = vmatmul.mubr.f32.gmra.mrb[0].mxu0 %v150
    %v349 = vpop.f32.mrb[0].mxu0
    %v350 = vadd.f32 0.0, %v349
    %v351 = vpop.f32.mrb[0].mxu0
    %352 = vmatprep.mubr.f32.mxu0 0.0
    %353 = vmatmul.mubr.f32.gmra.mrb[0].mxu0 %v153
    %v354 = vpop.f32.mrb[0].mxu0
    %v355 = vadd.f32 0.0, %v354
    %v356 = vpop.f32.mrb[0].mxu0
    %357 = vmatprep.mubr.f32.mxu0 0.0
    %358 = vmatmul.mubr.f32.gmra.mrb[0].mxu0 %v156
    %v359 = vpop.f32.mrb[0].mxu0
    %v360 = vadd.f32 0.0, %v359
    %v361 = vpop.f32.mrb[0].mxu0
    %362 = vmatprep.mubr.f32.mxu0 0.0
    %363 = vmatmul.mubr.f32.gmra.mrb[0].mxu0 %v159
    %v364 = vpop.f32.mrb[0].mxu0
    %v365 = vadd.f32 0.0, %v364
    %v366 = vpop.f32.mrb[0].mxu0
    %367 = vmatprep.mubr.f32.mxu0 0.0
    %368 = vmatmul.mubr.f32.gmra.mrb[0].mxu0 %v162
    %v369 = vpop.f32.mrb[0].mxu0
    %v370 = vadd.f32 0.0, %v369
    %v371 = vpop.f32.mrb[0].mxu0
    %372 = vmatprep.mubr.f32.mxu0 0.0
    %373 = vmatmul.mubr.f32.gmra.mrb[0].mxu0 %v165
    %v374 = vpop.f32.mrb[0].mxu0
    %v375 = vadd.f32 0.0, %v374
    %v376 = vpop.f32.mrb[0].mxu0
    %377 = vmatprep.mubr.f32.mxu0 0.0
    %378 = vmatmul.mubr.f32.gmra.mrb[0].mxu0 %v168
    %v379 = vpop.f32.mrb[0].mxu0
    %v380 = vadd.f32 0.0, %v379
    %v381 = vpop.f32.mrb[0].mxu0
    %382 = vmatprep.mubr.f32.mxu0 0.0
    %383 = vmatmul.mubr.f32.gmra.mrb[0].mxu0 %v171
    %v384 = vpop.f32.mrb[0].mxu0
    %v385 = vadd.f32 0.0, %v384
    %v386 = vpop.f32.mrb[0].mxu0
    %387 = vmatprep.mubr.f32.mxu0 0.0
    %388 = vmatmul.mubr.f32.gmra.mrb[0].mxu0 %v174
    %v389 = vpop.f32.mrb[0].mxu0
    %v390 = vadd.f32 0.0, %v389
    %v391 = vpop.f32.mrb[0].mxu0
    %392 = vmatprep.mubr.f32.mxu0 0.0
    %393 = vmatmul.mubr.f32.gmra.mrb[0].mxu0 %v177
    %v394 = vpop.f32.mrb[0].mxu0
    %v395 = vadd.f32 0.0, %v394
    %v396 = vpop.f32.mrb[0].mxu0
    %397 = vmatprep.mubr.f32.mxu0 0.0
    %398 = vmatmul.mubr.f32.gmra.mrb[0].mxu0 %v180
    %v399 = vpop.f32.mrb[0].mxu0
    %v400 = vadd.f32 0.0, %v399
    %v401 = vpop.f32.mrb[0].mxu0
    %402 = vmatprep.mubr.f32.mxu0 0.0
    %403 = vmatmul.mubr.f32.gmra.mrb[0].mxu0 %v183
    %v404 = vpop.f32.mrb[0].mxu0
    %v405 = vadd.f32 0.0, %v404
    %v406 = vpop.f32.mrb[0].mxu0
    %407 = vmatprep.mubr.f32.mxu0 0.0
    %408 = vmatmul.mubr.f32.gmra.mrb[0].mxu0 %v186
    %v409 = vpop.f32.mrb[0].mxu0
    %v410 = vadd.f32 0.0, %v409
    %v411 = vpop.f32.mrb[0].mxu0
    %412 = vdwg.mxu0
    %v413 = vmax.f32 %v255, 0.0
    %v414 = vmax.f32 %v260, 0.0
    %v415 = vmax.f32 %v265, 0.0
    %v416 = vmax.f32 %v270, 0.0
    %v417 = vmax.f32 %v275, 0.0
    %v418 = vmax.f32 %v280, 0.0
    %v419 = vmax.f32 %v285, 0.0
    %v420 = vmax.f32 %v290, 0.0
    %v421 = vmax.f32 %v295, 0.0
    %v422 = vmax.f32 %v300, 0.0
    %v423 = vmax.f32 %v305, 0.0
    %v424 = vmax.f32 %v310, 0.0
    %v425 = vmax.f32 %v315, 0.0
    %v426 = vmax.f32 %v320, 0.0
    %v427 = vmax.f32 %v325, 0.0
    %v428 = vmax.f32 %v330, 0.0
    %v429 = vmax.f32 %v335, 0.0
    %v430 = vmax.f32 %v340, 0.0
    %v431 = vmax.f32 %v345, 0.0
    %v432 = vmax.f32 %v350, 0.0
    %v433 = vmax.f32 %v355, 0.0
    %v434 = vmax.f32 %v360, 0.0
    %v435 = vmax.f32 %v365, 0.0
    %v436 = vmax.f32 %v370, 0.0
    %v437 = vmax.f32 %v375, 0.0
    %v438 = vmax.f32 %v380, 0.0
    %v439 = vmax.f32 %v385, 0.0
    %v440 = vmax.f32 %v390, 0.0
    %v441 = vmax.f32 %v395, 0.0
    %v442 = vmax.f32 %v400, 0.0
    %v443 = vmax.f32 %v405, 0.0
    %v444 = vmax.f32 %v410, 0.0
    %477 = vrot.lane.b32.xlu0 %v413, 64
    %v478 = vpop.permute.xlu0 %477
    %479 = vrot.lane.b32.xlu0 %v414, 64
    %v480 = vpop.permute.xlu0 %479
    %481 = vrot.lane.b32.xlu0 %v415, 64
    %v482 = vpop.permute.xlu0 %481
    %483 = vrot.lane.b32.xlu0 %v416, 64
    %v484 = vpop.permute.xlu0 %483
    %485 = vrot.lane.b32.xlu0 %v417, 64
    %v486 = vpop.permute.xlu0 %485
    %487 = vrot.lane.b32.xlu0 %v418, 64
    %v488 = vpop.permute.xlu0 %487
    %489 = vrot.lane.b32.xlu0 %v419, 64
    %v490 = vpop.permute.xlu0 %489
    %491 = vrot.lane.b32.xlu0 %v420, 64
    %v492 = vpop.permute.xlu0 %491
    %493 = vrot.lane.b32.xlu0 %v421, 64
    %v494 = vpop.permute.xlu0 %493
    %495 = vrot.lane.b32.xlu0 %v422, 64
    %v496 = vpop.permute.xlu0 %495
    %497 = vrot.lane.b32.xlu0 %v423, 64
    %v498 = vpop.permute.xlu0 %497
    %499 = vrot.lane.b32.xlu0 %v424, 64
    %v500 = vpop.permute.xlu0 %499
    %501 = vrot.lane.b32.xlu0 %v425, 64
    %v502 = vpop.permute.xlu0 %501
    %503 = vrot.lane.b32.xlu0 %v426, 64
    %v504 = vpop.permute.xlu0 %503
    %505 = vrot.lane.b32.xlu0 %v427, 64
    %v506 = vpop.permute.xlu0 %505
    %507 = vrot.lane.b32.xlu0 %v428, 64
    %v508 = vpop.permute.xlu0 %507
    %509 = vrot.lane.b32.xlu0 %v429, 64
    %v510 = vpop.permute.xlu0 %509
    %511 = vrot.lane.b32.xlu0 %v430, 64
    %v512 = vpop.permute.xlu0 %511
    %513 = vrot.lane.b32.xlu0 %v431, 64
    %v514 = vpop.permute.xlu0 %513
    %515 = vrot.lane.b32.xlu0 %v432, 64
    %v516 = vpop.permute.xlu0 %515
    %517 = vrot.lane.b32.xlu0 %v433, 64
    %v518 = vpop.permute.xlu0 %517
    %519 = vrot.lane.b32.xlu0 %v434, 64
    %v520 = vpop.permute.xlu0 %519
    %521 = vrot.lane.b32.xlu0 %v435, 64
    %v522 = vpop.permute.xlu0 %521
    %523 = vrot.lane.b32.xlu0 %v436, 64
    %v524 = vpop.permute.xlu0 %523
    %525 = vrot.lane.b32.xlu0 %v437, 64
    %v526 = vpop.permute.xlu0 %525
    %527 = vrot.lane.b32.xlu0 %v438, 64
    %v528 = vpop.permute.xlu0 %527
    %529 = vrot.lane.b32.xlu0 %v439, 64
    %v530 = vpop.permute.xlu0 %529
    %531 = vrot.lane.b32.xlu0 %v440, 64
    %v532 = vpop.permute.xlu0 %531
    %533 = vrot.lane.b32.xlu0 %v441, 64
    %v534 = vpop.permute.xlu0 %533
    %535 = vrot.lane.b32.xlu0 %v442, 64
    %v536 = vpop.permute.xlu0 %535
    %537 = vrot.lane.b32.xlu0 %v443, 64
    %v538 = vpop.permute.xlu0 %537
    %539 = vrot.lane.b32.xlu0 %v444, 64
    %v540 = vpop.permute.xlu0 %539
    %vm541 = vcmask 261120
    %v542 = vsel %vm541, %v478, 0
    %v544 = vsel %vm541, %v480, 0
    %v546 = vsel %vm541, %v482, 0
    %v548 = vsel %vm541, %v484, 0
    %v550 = vsel %vm541, %v486, 0
    %v552 = vsel %vm541, %v488, 0
    %v554 = vsel %vm541, %v490, 0
    %v556 = vsel %vm541, %v492, 0
    %v558 = vsel %vm541, %v494, 0
    %v560 = vsel %vm541, %v496, 0
    %v562 = vsel %vm541, %v498, 0
    %v564 = vsel %vm541, %v500, 0
    %v566 = vsel %vm541, %v502, 0
    %v568 = vsel %vm541, %v504, 0
    %v570 = vsel %vm541, %v506, 0
    %v572 = vsel %vm541, %v508, 0
    %v574 = vsel %vm541, %v510, 0
    %v576 = vsel %vm541, %v512, 0
    %v578 = vsel %vm541, %v514, 0
    %v580 = vsel %vm541, %v516, 0
    %v582 = vsel %vm541, %v518, 0
    %v584 = vsel %vm541, %v520, 0
    %v586 = vsel %vm541, %v522, 0
    %v588 = vsel %vm541, %v524, 0
    %v590 = vsel %vm541, %v526, 0
    %v592 = vsel %vm541, %v528, 0
    %v594 = vsel %vm541, %v530, 0
    %v596 = vsel %vm541, %v532, 0
    %v598 = vsel %vm541, %v534, 0
    %v600 = vsel %vm541, %v536, 0
    %v602 = vsel %vm541, %v538, 0
    %v604 = vsel %vm541, %v540, 0
    %606 = vmatprep.subr.mxu0 0.0
    %607 = vmatpush1.msra.mxu0 %v69
    %608 = vmatprep.subr.mxu0 0.0
    %609 = vmatpush1.msra.mxu0 %v70
    %610 = vmatprep.subr.mxu0 0.0
    %611 = vmatpush1.msra.mxu0 %v71
    %612 = vmatprep.subr.mxu0 0.0
    %613 = vmatpush1.msra.mxu0 %v72
    %614 = vmatprep.subr.mxu0 0.0
    %615 = vmatpush1.msra.mxu0 0.0
    %616 = vmatprep.subr.mxu0 0.0
    %617 = vmatpush1.msra.mxu0 0.0
    %618 = vmatprep.subr.mxu0 0.0
    %619 = vmatpush1.msra.mxu0 0.0
    %620 = vmatprep.subr.mxu0 0.0
    %621 = vmatpush1.msra.mxu0 0.0
    %622 = vmatprep.subr.mxu0 0.0
    %623 = vmatpush1.msra.mxu0 0.0
    %624 = vmatprep.subr.mxu0 0.0
    %625 = vmatpush1.msra.mxu0 0.0
    %626 = vmatprep.subr.mxu0 0.0
    %627 = vmatpush1.msra.mxu0 0.0
    %628 = vmatprep.subr.mxu0 0.0
    %629 = vmatpush1.msra.mxu0 0.0
    %630 = vmatprep.subr.mxu0 0.0
    %631 = vmatpush1.msra.mxu0 0.0
    %632 = vmatprep.subr.mxu0 0.0
    %633 = vmatpush1.msra.mxu0 0.0
    %634 = vmatprep.subr.mxu0 0.0
    %635 = vmatpush1.msra.mxu0 0.0
    %636 = vmatprep.subr.mxu0 0.0
    %637 = vmatpush1.msra.mxu0 0.0
    %638 = vmatprep.subr.mxu0 0.0
    %639 = vmatpush1.msra.mxu0 0.0
    %640 = vmatprep.subr.mxu0 0.0
    %641 = vmatpush1.msra.mxu0 0.0
    %642 = vmatprep.subr.mxu0 0.0
    %643 = vmatpush1.msra.mxu0 0.0
    %644 = vmatprep.subr.mxu0 0.0
    %645 = vmatpush1.msra.mxu0 0.0
    %646 = vmatprep.subr.mxu0 0.0
    %647 = vmatpush1.msra.mxu0 0.0
    %648 = vmatprep.subr.mxu0 0.0
    %649 = vmatpush1.msra.mxu0 0.0
    %650 = vmatprep.subr.mxu0 0.0
    %651 = vmatpush1.msra.mxu0 0.0
    %652 = vmatprep.subr.mxu0 0.0
    %653 = vmatpush1.msra.mxu0 0.0
    %654 = vmatprep.subr.mxu0 0.0
    %655 = vmatpush1.msra.mxu0 0.0
    %656 = vmatprep.subr.mxu0 0.0
    %657 = vmatpush1.msra.mxu0 0.0
    %658 = vmatprep.subr.mxu0 0.0
    %659 = vmatpush1.msra.mxu0 0.0
    %660 = vmatprep.subr.mxu0 0.0
    %661 = vmatpush1.msra.mxu0 0.0
    %662 = vmatprep.subr.mxu0 0.0
    %663 = vmatpush1.msra.mxu0 0.0
    %664 = vmatprep.subr.mxu0 0.0
    %665 = vmatpush1.msra.mxu0 0.0
    %666 = vmatprep.subr.mxu0 0.0
    %667 = vmatpush1.msra.mxu0 0.0
    %668 = vmatprep.subr.mxu0 0.0
    %669 = vmatpush1.msra.mxu0 0.0
    %670 = vmatprep.mubr.f32.mxu0 0.0
    %671 = vmatmul.mubr.f32.gmra.mrb[0].mxu0 %v542
    %v672 = vpop.f32.mrb[0].mxu0
    %v673 = vadd.f32 0.0, %v672
    %v674 = vpop.f32.mrb[0].mxu0
    %675 = vmatprep.mubr.f32.mxu0 0.0
    %676 = vmatmul.mubr.f32.gmra.mrb[0].mxu0 %v544
    %v677 = vpop.f32.mrb[0].mxu0
    %v678 = vadd.f32 0.0, %v677
    %v679 = vpop.f32.mrb[0].mxu0
    %680 = vmatprep.mubr.f32.mxu0 0.0
    %681 = vmatmul.mubr.f32.gmra.mrb[0].mxu0 %v546
    %v682 = vpop.f32.mrb[0].mxu0
    %v683 = vadd.f32 0.0, %v682
    %v684 = vpop.f32.mrb[0].mxu0
    %685 = vmatprep.mubr.f32.mxu0 0.0
    %686 = vmatmul.mubr.f32.gmra.mrb[0].mxu0 %v548
    %v687 = vpop.f32.mrb[0].mxu0
    %v688 = vadd.f32 0.0, %v687
    %v689 = vpop.f32.mrb[0].mxu0
    %690 = vmatprep.mubr.f32.mxu0 0.0
    %691 = vmatmul.mubr.f32.gmra.mrb[0].mxu0 %v550
    %v692 = vpop.f32.mrb[0].mxu0
    %v693 = vadd.f32 0.0, %v692
    %v694 = vpop.f32.mrb[0].mxu0
    %695 = vmatprep.mubr.f32.mxu0 0.0
    %696 = vmatmul.mubr.f32.gmra.mrb[0].mxu0 %v552
    %v697 = vpop.f32.mrb[0].mxu0
    %v698 = vadd.f32 0.0, %v697
    %v699 = vpop.f32.mrb[0].mxu0
    %700 = vmatprep.mubr.f32.mxu0 0.0
    %701 = vmatmul.mubr.f32.gmra.mrb[0].mxu0 %v554
    %v702 = vpop.f32.mrb[0].mxu0
    %v703 = vadd.f32 0.0, %v702
    %v704 = vpop.f32.mrb[0].mxu0
    %705 = vmatprep.mubr.f32.mxu0 0.0
    %706 = vmatmul.mubr.f32.gmra.mrb[0].mxu0 %v556
    %v707 = vpop.f32.mrb[0].mxu0
    %v708 = vadd.f32 0.0, %v707
    %v709 = vpop.f32.mrb[0].mxu0
    %710 = vmatprep.mubr.f32.mxu0 0.0
    %711 = vmatmul.mubr.f32.gmra.mrb[0].mxu0 %v558
    %v712 = vpop.f32.mrb[0].mxu0
    %v713 = vadd.f32 0.0, %v712
    %v714 = vpop.f32.mrb[0].mxu0
    %715 = vmatprep.mubr.f32.mxu0 0.0
    %716 = vmatmul.mubr.f32.gmra.mrb[0].mxu0 %v560
    %v717 = vpop.f32.mrb[0].mxu0
    %v718 = vadd.f32 0.0, %v717
    %v719 = vpop.f32.mrb[0].mxu0
    %720 = vmatprep.mubr.f32.mxu0 0.0
    %721 = vmatmul.mubr.f32.gmra.mrb[0].mxu0 %v562
    %v722 = vpop.f32.mrb[0].mxu0
    %v723 = vadd.f32 0.0, %v722
    %v724 = vpop.f32.mrb[0].mxu0
    %725 = vmatprep.mubr.f32.mxu0 0.0
    %726 = vmatmul.mubr.f32.gmra.mrb[0].mxu0 %v564
    %v727 = vpop.f32.mrb[0].mxu0
    %v728 = vadd.f32 0.0, %v727
    %v729 = vpop.f32.mrb[0].mxu0
    %730 = vmatprep.mubr.f32.mxu0 0.0
    %731 = vmatmul.mubr.f32.gmra.mrb[0].mxu0 %v566
    %v732 = vpop.f32.mrb[0].mxu0
    %v733 = vadd.f32 0.0, %v732
    %v734 = vpop.f32.mrb[0].mxu0
    %735 = vmatprep.mubr.f32.mxu0 0.0
    %736 = vmatmul.mubr.f32.gmra.mrb[0].mxu0 %v568
    %v737 = vpop.f32.mrb[0].mxu0
    %v738 = vadd.f32 0.0, %v737
    %v739 = vpop.f32.mrb[0].mxu0
    %740 = vmatprep.mubr.f32.mxu0 0.0
    %741 = vmatmul.mubr.f32.gmra.mrb[0].mxu0 %v570
    %v742 = vpop.f32.mrb[0].mxu0
    %v743 = vadd.f32 0.0, %v742
    %v744 = vpop.f32.mrb[0].mxu0
    %745 = vmatprep.mubr.f32.mxu0 0.0
    %746 = vmatmul.mubr.f32.gmra.mrb[0].mxu0 %v572
    %v747 = vpop.f32.mrb[0].mxu0
    %v748 = vadd.f32 0.0, %v747
    %v749 = vpop.f32.mrb[0].mxu0
    %750 = vmatprep.mubr.f32.mxu0 0.0
    %751 = vmatmul.mubr.f32.gmra.mrb[0].mxu0 %v574
    %v752 = vpop.f32.mrb[0].mxu0
    %v753 = vadd.f32 0.0, %v752
    %v754 = vpop.f32.mrb[0].mxu0
    %755 = vmatprep.mubr.f32.mxu0 0.0
    %756 = vmatmul.mubr.f32.gmra.mrb[0].mxu0 %v576
    %v757 = vpop.f32.mrb[0].mxu0
    %v758 = vadd.f32 0.0, %v757
    %v759 = vpop.f32.mrb[0].mxu0
    %760 = vmatprep.mubr.f32.mxu0 0.0
    %761 = vmatmul.mubr.f32.gmra.mrb[0].mxu0 %v578
    %v762 = vpop.f32.mrb[0].mxu0
    %v763 = vadd.f32 0.0, %v762
    %v764 = vpop.f32.mrb[0].mxu0
    %765 = vmatprep.mubr.f32.mxu0 0.0
    %766 = vmatmul.mubr.f32.gmra.mrb[0].mxu0 %v580
    %v767 = vpop.f32.mrb[0].mxu0
    %v768 = vadd.f32 0.0, %v767
    %v769 = vpop.f32.mrb[0].mxu0
    %770 = vmatprep.mubr.f32.mxu0 0.0
    %771 = vmatmul.mubr.f32.gmra.mrb[0].mxu0 %v582
    %v772 = vpop.f32.mrb[0].mxu0
    %v773 = vadd.f32 0.0, %v772
    %v774 = vpop.f32.mrb[0].mxu0
    %775 = vmatprep.mubr.f32.mxu0 0.0
    %776 = vmatmul.mubr.f32.gmra.mrb[0].mxu0 %v584
    %v777 = vpop.f32.mrb[0].mxu0
    %v778 = vadd.f32 0.0, %v777
    %v779 = vpop.f32.mrb[0].mxu0
    %780 = vmatprep.mubr.f32.mxu0 0.0
    %781 = vmatmul.mubr.f32.gmra.mrb[0].mxu0 %v586
    %v782 = vpop.f32.mrb[0].mxu0
    %v783 = vadd.f32 0.0, %v782
    %v784 = vpop.f32.mrb[0].mxu0
    %785 = vmatprep.mubr.f32.mxu0 0.0
    %786 = vmatmul.mubr.f32.gmra.mrb[0].mxu0 %v588
    %v787 = vpop.f32.mrb[0].mxu0
    %v788 = vadd.f32 0.0, %v787
    %v789 = vpop.f32.mrb[0].mxu0
    %790 = vmatprep.mubr.f32.mxu0 0.0
    %791 = vmatmul.mubr.f32.gmra.mrb[0].mxu0 %v590
    %v792 = vpop.f32.mrb[0].mxu0
    %v793 = vadd.f32 0.0, %v792
    %v794 = vpop.f32.mrb[0].mxu0
    %795 = vmatprep.mubr.f32.mxu0 0.0
    %796 = vmatmul.mubr.f32.gmra.mrb[0].mxu0 %v592
    %v797 = vpop.f32.mrb[0].mxu0
    %v798 = vadd.f32 0.0, %v797
    %v799 = vpop.f32.mrb[0].mxu0
    %800 = vmatprep.mubr.f32.mxu0 0.0
    %801 = vmatmul.mubr.f32.gmra.mrb[0].mxu0 %v594
    %v802 = vpop.f32.mrb[0].mxu0
    %v803 = vadd.f32 0.0, %v802
    %v804 = vpop.f32.mrb[0].mxu0
    %805 = vmatprep.mubr.f32.mxu0 0.0
    %806 = vmatmul.mubr.f32.gmra.mrb[0].mxu0 %v596
    %v807 = vpop.f32.mrb[0].mxu0
    %v808 = vadd.f32 0.0, %v807
    %v809 = vpop.f32.mrb[0].mxu0
    %810 = vmatprep.mubr.f32.mxu0 0.0
    %811 = vmatmul.mubr.f32.gmra.mrb[0].mxu0 %v598
    %v812 = vpop.f32.mrb[0].mxu0
    %v813 = vadd.f32 0.0, %v812
    %v814 = vpop.f32.mrb[0].mxu0
    %815 = vmatprep.mubr.f32.mxu0 0.0
    %816 = vmatmul.mubr.f32.gmra.mrb[0].mxu0 %v600
    %v817 = vpop.f32.mrb[0].mxu0
    %v818 = vadd.f32 0.0, %v817
    %v819 = vpop.f32.mrb[0].mxu0
    %820 = vmatprep.mubr.f32.mxu0 0.0
    %821 = vmatmul.mubr.f32.gmra.mrb[0].mxu0 %v602
    %v822 = vpop.f32.mrb[0].mxu0
    %v823 = vadd.f32 0.0, %v822
    %v824 = vpop.f32.mrb[0].mxu0
    %825 = vmatprep.mubr.f32.mxu0 0.0
    %826 = vmatmul.mubr.f32.gmra.mrb[0].mxu0 %v604
    %v827 = vpop.f32.mrb[0].mxu0
    %v828 = vadd.f32 0.0, %v827
    %v829 = vpop.f32.mrb[0].mxu0
    %830 = vdwg.mxu0
    %v831 = vadd.f32 %v255, %v673
    %v832 = vadd.f32 %v260, %v678
    %v833 = vadd.f32 %v265, %v683
    %v834 = vadd.f32 %v270, %v688
    %v835 = vadd.f32 %v275, %v693
    %v836 = vadd.f32 %v280, %v698
    %v837 = vadd.f32 %v285, %v703
    %v838 = vadd.f32 %v290, %v708
    %v839 = vadd.f32 %v295, %v713
    %v840 = vadd.f32 %v300, %v718
    %v841 = vadd.f32 %v305, %v723
    %v842 = vadd.f32 %v310, %v728
    %v843 = vadd.f32 %v315, %v733
    %v844 = vadd.f32 %v320, %v738
    %v845 = vadd.f32 %v325, %v743
    %v846 = vadd.f32 %v330, %v748
    %v847 = vadd.f32 %v335, %v753
    %v848 = vadd.f32 %v340, %v758
    %v849 = vadd.f32 %v345, %v763
    %v850 = vadd.f32 %v350, %v768
    %v851 = vadd.f32 %v355, %v773
    %v852 = vadd.f32 %v360, %v778
    %v853 = vadd.f32 %v365, %v783
    %v854 = vadd.f32 %v370, %v788
    %v855 = vadd.f32 %v375, %v793
    %v856 = vadd.f32 %v380, %v798
    %v857 = vadd.f32 %v385, %v803
    %v858 = vadd.f32 %v390, %v808
    %v859 = vadd.f32 %v395, %v813
    %v860 = vadd.f32 %v400, %v818
    %v861 = vadd.f32 %v405, %v823
    %v862 = vadd.f32 %v410, %v828
    %v863 = vlaneseq
    %v864 = vshrl.u32 %v863, 7
    %v865 = vsub.s32 0, %v864
    %v866 = vrot.slane %v88, %v865
    %v868 = vsel %vm541, %v831, 0
    %v871 = vsel %vm541, %v832, 0
    %v874 = vsel %vm541, %v833, 0
    %v877 = vsel %vm541, %v834, 0
    %v880 = vsel %vm541, %v835, 0
    %v883 = vsel %vm541, %v836, 0
    %v886 = vsel %vm541, %v837, 0
    %v889 = vsel %vm541, %v838, 0
    %v892 = vsel %vm541, %v839, 0
    %v895 = vsel %vm541, %v840, 0
    %v898 = vsel %vm541, %v841, 0
    %v901 = vsel %vm541, %v842, 0
    %v904 = vsel %vm541, %v843, 0
    %v907 = vsel %vm541, %v844, 0
    %v910 = vsel %vm541, %v845, 0
    %v913 = vsel %vm541, %v846, 0
    %v916 = vsel %vm541, %v847, 0
    %v919 = vsel %vm541, %v848, 0
    %v922 = vsel %vm541, %v849, 0
    %v925 = vsel %vm541, %v850, 0
    %v928 = vsel %vm541, %v851, 0
    %v931 = vsel %vm541, %v852, 0
    %v934 = vsel %vm541, %v853, 0
    %v937 = vsel %vm541, %v854, 0
    %v940 = vsel %vm541, %v855, 0
    %v943 = vsel %vm541, %v856, 0
    %v946 = vsel %vm541, %v857, 0
    %v949 = vsel %vm541, %v858, 0
    %v952 = vsel %vm541, %v859, 0
    %v955 = vsel %vm541, %v860, 0
    %v958 = vsel %vm541, %v861, 0
    %v961 = vsel %vm541, %v862, 0
    %963 = vmatprep.subr.mxu0 0.0
    %964 = vmatpush1.msra.mxu0 %v74
    %965 = vmatprep.subr.mxu0 0.0
    %966 = vmatpush1.msra.mxu0 %v75
    %967 = vmatprep.subr.mxu0 0.0
    %968 = vmatpush1.msra.mxu0 %v76
    %969 = vmatprep.subr.mxu0 0.0
    %970 = vmatpush1.msra.mxu0 %v77
    %971 = vmatprep.subr.mxu0 0.0
    %972 = vmatpush1.msra.mxu0 0.0
    %973 = vmatprep.subr.mxu0 0.0
    %974 = vmatpush1.msra.mxu0 0.0
    %975 = vmatprep.subr.mxu0 0.0
    %976 = vmatpush1.msra.mxu0 0.0
    %977 = vmatprep.subr.mxu0 0.0
    %978 = vmatpush1.msra.mxu0 0.0
    %979 = vmatprep.subr.mxu0 0.0
    %980 = vmatpush1.msra.mxu0 0.0
    %981 = vmatprep.subr.mxu0 0.0
    %982 = vmatpush1.msra.mxu0 0.0
    %983 = vmatprep.subr.mxu0 0.0
    %984 = vmatpush1.msra.mxu0 0.0
    %985 = vmatprep.subr.mxu0 0.0
    %986 = vmatpush1.msra.mxu0 0.0
    %987 = vmatprep.subr.mxu0 0.0
    %988 = vmatpush1.msra.mxu0 0.0
    %989 = vmatprep.subr.mxu0 0.0
    %990 = vmatpush1.msra.mxu0 0.0
    %991 = vmatprep.subr.mxu0 0.0
    %992 = vmatpush1.msra.mxu0 0.0
    %993 = vmatprep.subr.mxu0 0.0
    %994 = vmatpush1.msra.mxu0 0.0
    %995 = vmatprep.subr.mxu0 0.0
    %996 = vmatpush1.msra.mxu0 0.0
    %997 = vmatprep.subr.mxu0 0.0
    %998 = vmatpush1.msra.mxu0 0.0
    %999 = vmatprep.subr.mxu0 0.0
    %1000 = vmatpush1.msra.mxu0 0.0
    %1001 = vmatprep.subr.mxu0 0.0
    %1002 = vmatpush1.msra.mxu0 0.0
    %1003 = vmatprep.subr.mxu0 0.0
    %1004 = vmatpush1.msra.mxu0 0.0
    %1005 = vmatprep.subr.mxu0 0.0
    %1006 = vmatpush1.msra.mxu0 0.0
    %1007 = vmatprep.subr.mxu0 0.0
    %1008 = vmatpush1.msra.mxu0 0.0
    %1009 = vmatprep.subr.mxu0 0.0
    %1010 = vmatpush1.msra.mxu0 0.0
    %1011 = vmatprep.subr.mxu0 0.0
    %1012 = vmatpush1.msra.mxu0 0.0
    %1013 = vmatprep.subr.mxu0 0.0
    %1014 = vmatpush1.msra.mxu0 0.0
    %1015 = vmatprep.subr.mxu0 0.0
    %1016 = vmatpush1.msra.mxu0 0.0
    %1017 = vmatprep.subr.mxu0 0.0
    %1018 = vmatpush1.msra.mxu0 0.0
    %1019 = vmatprep.subr.mxu0 0.0
    %1020 = vmatpush1.msra.mxu0 0.0
    %1021 = vmatprep.subr.mxu0 0.0
    %1022 = vmatpush1.msra.mxu0 0.0
    %1023 = vmatprep.subr.mxu0 0.0
    %1024 = vmatpush1.msra.mxu0 0.0
    %1025 = vmatprep.subr.mxu0 0.0
    %1026 = vmatpush1.msra.mxu0 0.0
    %1027 = vmatprep.mubr.f32.mxu0 0.0
    %1028 = vmatmul.mubr.f32.gmra.mrb[0].mxu0 %v868
    %v1029 = vpop.f32.mrb[0].mxu0
    %v1030 = vadd.f32 %v866, %v1029
    %v1031 = vpop.f32.mrb[0].mxu0
    %1032 = vmatprep.mubr.f32.mxu0 0.0
    %1033 = vmatmul.mubr.f32.gmra.mrb[0].mxu0 %v871
    %v1034 = vpop.f32.mrb[0].mxu0
    %v1035 = vadd.f32 %v866, %v1034
    %v1036 = vpop.f32.mrb[0].mxu0
    %1037 = vmatprep.mubr.f32.mxu0 0.0
    %1038 = vmatmul.mubr.f32.gmra.mrb[0].mxu0 %v874
    %v1039 = vpop.f32.mrb[0].mxu0
    %v1040 = vadd.f32 %v866, %v1039
    %v1041 = vpop.f32.mrb[0].mxu0
    %1042 = vmatprep.mubr.f32.mxu0 0.0
    %1043 = vmatmul.mubr.f32.gmra.mrb[0].mxu0 %v877
    %v1044 = vpop.f32.mrb[0].mxu0
    %v1045 = vadd.f32 %v866, %v1044
    %v1046 = vpop.f32.mrb[0].mxu0
    %1047 = vmatprep.mubr.f32.mxu0 0.0
    %1048 = vmatmul.mubr.f32.gmra.mrb[0].mxu0 %v880
    %v1049 = vpop.f32.mrb[0].mxu0
    %v1050 = vadd.f32 %v866, %v1049
    %v1051 = vpop.f32.mrb[0].mxu0
    %1052 = vmatprep.mubr.f32.mxu0 0.0
    %1053 = vmatmul.mubr.f32.gmra.mrb[0].mxu0 %v883
    %v1054 = vpop.f32.mrb[0].mxu0
    %v1055 = vadd.f32 %v866, %v1054
    %v1056 = vpop.f32.mrb[0].mxu0
    %1057 = vmatprep.mubr.f32.mxu0 0.0
    %1058 = vmatmul.mubr.f32.gmra.mrb[0].mxu0 %v886
    %v1059 = vpop.f32.mrb[0].mxu0
    %v1060 = vadd.f32 %v866, %v1059
    %v1061 = vpop.f32.mrb[0].mxu0
    %1062 = vmatprep.mubr.f32.mxu0 0.0
    %1063 = vmatmul.mubr.f32.gmra.mrb[0].mxu0 %v889
    %v1064 = vpop.f32.mrb[0].mxu0
    %v1065 = vadd.f32 %v866, %v1064
    %v1066 = vpop.f32.mrb[0].mxu0
    %1067 = vmatprep.mubr.f32.mxu0 0.0
    %1068 = vmatmul.mubr.f32.gmra.mrb[0].mxu0 %v892
    %v1069 = vpop.f32.mrb[0].mxu0
    %v1070 = vadd.f32 %v866, %v1069
    %v1071 = vpop.f32.mrb[0].mxu0
    %1072 = vmatprep.mubr.f32.mxu0 0.0
    %1073 = vmatmul.mubr.f32.gmra.mrb[0].mxu0 %v895
    %v1074 = vpop.f32.mrb[0].mxu0
    %v1075 = vadd.f32 %v866, %v1074
    %v1076 = vpop.f32.mrb[0].mxu0
    %1077 = vmatprep.mubr.f32.mxu0 0.0
    %1078 = vmatmul.mubr.f32.gmra.mrb[0].mxu0 %v898
    %v1079 = vpop.f32.mrb[0].mxu0
    %v1080 = vadd.f32 %v866, %v1079
    %v1081 = vpop.f32.mrb[0].mxu0
    %1082 = vmatprep.mubr.f32.mxu0 0.0
    %1083 = vmatmul.mubr.f32.gmra.mrb[0].mxu0 %v901
    %v1084 = vpop.f32.mrb[0].mxu0
    %v1085 = vadd.f32 %v866, %v1084
    %v1086 = vpop.f32.mrb[0].mxu0
    %1087 = vmatprep.mubr.f32.mxu0 0.0
    %1088 = vmatmul.mubr.f32.gmra.mrb[0].mxu0 %v904
    %v1089 = vpop.f32.mrb[0].mxu0
    %v1090 = vadd.f32 %v866, %v1089
    %v1091 = vpop.f32.mrb[0].mxu0
    %1092 = vmatprep.mubr.f32.mxu0 0.0
    %1093 = vmatmul.mubr.f32.gmra.mrb[0].mxu0 %v907
    %v1094 = vpop.f32.mrb[0].mxu0
    %v1095 = vadd.f32 %v866, %v1094
    %v1096 = vpop.f32.mrb[0].mxu0
    %1097 = vmatprep.mubr.f32.mxu0 0.0
    %1098 = vmatmul.mubr.f32.gmra.mrb[0].mxu0 %v910
    %v1099 = vpop.f32.mrb[0].mxu0
    %v1100 = vadd.f32 %v866, %v1099
    %v1101 = vpop.f32.mrb[0].mxu0
    %1102 = vmatprep.mubr.f32.mxu0 0.0
    %1103 = vmatmul.mubr.f32.gmra.mrb[0].mxu0 %v913
    %v1104 = vpop.f32.mrb[0].mxu0
    %v1105 = vadd.f32 %v866, %v1104
    %v1106 = vpop.f32.mrb[0].mxu0
    %1107 = vmatprep.mubr.f32.mxu0 0.0
    %1108 = vmatmul.mubr.f32.gmra.mrb[0].mxu0 %v916
    %v1109 = vpop.f32.mrb[0].mxu0
    %v1110 = vadd.f32 %v866, %v1109
    %v1111 = vpop.f32.mrb[0].mxu0
    %1112 = vmatprep.mubr.f32.mxu0 0.0
    %1113 = vmatmul.mubr.f32.gmra.mrb[0].mxu0 %v919
    %v1114 = vpop.f32.mrb[0].mxu0
    %v1115 = vadd.f32 %v866, %v1114
    %v1116 = vpop.f32.mrb[0].mxu0
    %1117 = vmatprep.mubr.f32.mxu0 0.0
    %1118 = vmatmul.mubr.f32.gmra.mrb[0].mxu0 %v922
    %v1119 = vpop.f32.mrb[0].mxu0
    %v1120 = vadd.f32 %v866, %v1119
    %v1121 = vpop.f32.mrb[0].mxu0
    %1122 = vmatprep.mubr.f32.mxu0 0.0
    %1123 = vmatmul.mubr.f32.gmra.mrb[0].mxu0 %v925
    %v1124 = vpop.f32.mrb[0].mxu0
    %v1125 = vadd.f32 %v866, %v1124
    %v1126 = vpop.f32.mrb[0].mxu0
    %1127 = vmatprep.mubr.f32.mxu0 0.0
    %1128 = vmatmul.mubr.f32.gmra.mrb[0].mxu0 %v928
    %v1129 = vpop.f32.mrb[0].mxu0
    %v1130 = vadd.f32 %v866, %v1129
    %v1131 = vpop.f32.mrb[0].mxu0
    %1132 = vmatprep.mubr.f32.mxu0 0.0
    %1133 = vmatmul.mubr.f32.gmra.mrb[0].mxu0 %v931
    %v1134 = vpop.f32.mrb[0].mxu0
    %v1135 = vadd.f32 %v866, %v1134
    %v1136 = vpop.f32.mrb[0].mxu0
    %1137 = vmatprep.mubr.f32.mxu0 0.0
    %1138 = vmatmul.mubr.f32.gmra.mrb[0].mxu0 %v934
    %v1139 = vpop.f32.mrb[0].mxu0
    %v1140 = vadd.f32 %v866, %v1139
    %v1141 = vpop.f32.mrb[0].mxu0
    %1142 = vmatprep.mubr.f32.mxu0 0.0
    %1143 = vmatmul.mubr.f32.gmra.mrb[0].mxu0 %v937
    %v1144 = vpop.f32.mrb[0].mxu0
    %v1145 = vadd.f32 %v866, %v1144
    %v1146 = vpop.f32.mrb[0].mxu0
    %1147 = vmatprep.mubr.f32.mxu0 0.0
    %1148 = vmatmul.mubr.f32.gmra.mrb[0].mxu0 %v940
    %v1149 = vpop.f32.mrb[0].mxu0
    %v1150 = vadd.f32 %v866, %v1149
    %v1151 = vpop.f32.mrb[0].mxu0
    %1152 = vmatprep.mubr.f32.mxu0 0.0
    %1153 = vmatmul.mubr.f32.gmra.mrb[0].mxu0 %v943
    %v1154 = vpop.f32.mrb[0].mxu0
    %v1155 = vadd.f32 %v866, %v1154
    %v1156 = vpop.f32.mrb[0].mxu0
    %1157 = vmatprep.mubr.f32.mxu0 0.0
    %1158 = vmatmul.mubr.f32.gmra.mrb[0].mxu0 %v946
    %v1159 = vpop.f32.mrb[0].mxu0
    %v1160 = vadd.f32 %v866, %v1159
    %v1161 = vpop.f32.mrb[0].mxu0
    %1162 = vmatprep.mubr.f32.mxu0 0.0
    %1163 = vmatmul.mubr.f32.gmra.mrb[0].mxu0 %v949
    %v1164 = vpop.f32.mrb[0].mxu0
    %v1165 = vadd.f32 %v866, %v1164
    %v1166 = vpop.f32.mrb[0].mxu0
    %1167 = vmatprep.mubr.f32.mxu0 0.0
    %1168 = vmatmul.mubr.f32.gmra.mrb[0].mxu0 %v952
    %v1169 = vpop.f32.mrb[0].mxu0
    %v1170 = vadd.f32 %v866, %v1169
    %v1171 = vpop.f32.mrb[0].mxu0
    %1172 = vmatprep.mubr.f32.mxu0 0.0
    %1173 = vmatmul.mubr.f32.gmra.mrb[0].mxu0 %v955
    %v1174 = vpop.f32.mrb[0].mxu0
    %v1175 = vadd.f32 %v866, %v1174
    %v1176 = vpop.f32.mrb[0].mxu0
    %1177 = vmatprep.mubr.f32.mxu0 0.0
    %1178 = vmatmul.mubr.f32.gmra.mrb[0].mxu0 %v958
    %v1179 = vpop.f32.mrb[0].mxu0
    %v1180 = vadd.f32 %v866, %v1179
    %v1181 = vpop.f32.mrb[0].mxu0
    %1182 = vmatprep.mubr.f32.mxu0 0.0
    %1183 = vmatmul.mubr.f32.gmra.mrb[0].mxu0 %v961
    %v1184 = vpop.f32.mrb[0].mxu0
    %v1185 = vadd.f32 %v866, %v1184
    %v1186 = vpop.f32.mrb[0].mxu0
    %1187 = vdwg.mxu0
    %v1188 = vmax.f32 %v1030, 0.0
    %v1189 = vmax.f32 %v1035, 0.0
    %v1190 = vmax.f32 %v1040, 0.0
    %v1191 = vmax.f32 %v1045, 0.0
    %v1192 = vmax.f32 %v1050, 0.0
    %v1193 = vmax.f32 %v1055, 0.0
    %v1194 = vmax.f32 %v1060, 0.0
    %v1195 = vmax.f32 %v1065, 0.0
    %v1196 = vmax.f32 %v1070, 0.0
    %v1197 = vmax.f32 %v1075, 0.0
    %v1198 = vmax.f32 %v1080, 0.0
    %v1199 = vmax.f32 %v1085, 0.0
    %v1200 = vmax.f32 %v1090, 0.0
    %v1201 = vmax.f32 %v1095, 0.0
    %v1202 = vmax.f32 %v1100, 0.0
    %v1203 = vmax.f32 %v1105, 0.0
    %v1204 = vmax.f32 %v1110, 0.0
    %v1205 = vmax.f32 %v1115, 0.0
    %v1206 = vmax.f32 %v1120, 0.0
    %v1207 = vmax.f32 %v1125, 0.0
    %v1208 = vmax.f32 %v1130, 0.0
    %v1209 = vmax.f32 %v1135, 0.0
    %v1210 = vmax.f32 %v1140, 0.0
    %v1211 = vmax.f32 %v1145, 0.0
    %v1212 = vmax.f32 %v1150, 0.0
    %v1213 = vmax.f32 %v1155, 0.0
    %v1214 = vmax.f32 %v1160, 0.0
    %v1215 = vmax.f32 %v1165, 0.0
    %v1216 = vmax.f32 %v1170, 0.0
    %v1217 = vmax.f32 %v1175, 0.0
    %v1218 = vmax.f32 %v1180, 0.0
    %v1219 = vmax.f32 %v1185, 0.0
    %v1220 = vlaneseq
    %v1221 = vshrl.u32 %v1220, 7
    %v1222 = vsub.s32 0, %v1221
    %v1223 = vrot.slane %v89, %v1222
    %v1225 = vsel %vm541, %v1188, 0
    %v1228 = vsel %vm541, %v1189, 0
    %v1231 = vsel %vm541, %v1190, 0
    %v1234 = vsel %vm541, %v1191, 0
    %v1237 = vsel %vm541, %v1192, 0
    %v1240 = vsel %vm541, %v1193, 0
    %v1243 = vsel %vm541, %v1194, 0
    %v1246 = vsel %vm541, %v1195, 0
    %v1249 = vsel %vm541, %v1196, 0
    %v1252 = vsel %vm541, %v1197, 0
    %v1255 = vsel %vm541, %v1198, 0
    %v1258 = vsel %vm541, %v1199, 0
    %v1261 = vsel %vm541, %v1200, 0
    %v1264 = vsel %vm541, %v1201, 0
    %v1267 = vsel %vm541, %v1202, 0
    %v1270 = vsel %vm541, %v1203, 0
    %v1273 = vsel %vm541, %v1204, 0
    %v1276 = vsel %vm541, %v1205, 0
    %v1279 = vsel %vm541, %v1206, 0
    %v1282 = vsel %vm541, %v1207, 0
    %v1285 = vsel %vm541, %v1208, 0
    %v1288 = vsel %vm541, %v1209, 0
    %v1291 = vsel %vm541, %v1210, 0
    %v1294 = vsel %vm541, %v1211, 0
    %v1297 = vsel %vm541, %v1212, 0
    %v1300 = vsel %vm541, %v1213, 0
    %v1303 = vsel %vm541, %v1214, 0
    %v1306 = vsel %vm541, %v1215, 0
    %v1309 = vsel %vm541, %v1216, 0
    %v1312 = vsel %vm541, %v1217, 0
    %v1315 = vsel %vm541, %v1218, 0
    %v1318 = vsel %vm541, %v1219, 0
    %1320 = vmatprep.subr.mxu0 0.0
    %1321 = vmatpush1.msra.mxu0 %v79
    %1322 = vmatprep.subr.mxu0 0.0
    %1323 = vmatpush1.msra.mxu0 %v80
    %1324 = vmatprep.subr.mxu0 0.0
    %1325 = vmatpush1.msra.mxu0 %v81
    %1326 = vmatprep.subr.mxu0 0.0
    %1327 = vmatpush1.msra.mxu0 %v82
    %1328 = vmatprep.subr.mxu0 0.0
    %1329 = vmatpush1.msra.mxu0 0.0
    %1330 = vmatprep.subr.mxu0 0.0
    %1331 = vmatpush1.msra.mxu0 0.0
    %1332 = vmatprep.subr.mxu0 0.0
    %1333 = vmatpush1.msra.mxu0 0.0
    %1334 = vmatprep.subr.mxu0 0.0
    %1335 = vmatpush1.msra.mxu0 0.0
    %1336 = vmatprep.subr.mxu0 0.0
    %1337 = vmatpush1.msra.mxu0 0.0
    %1338 = vmatprep.subr.mxu0 0.0
    %1339 = vmatpush1.msra.mxu0 0.0
    %1340 = vmatprep.subr.mxu0 0.0
    %1341 = vmatpush1.msra.mxu0 0.0
    %1342 = vmatprep.subr.mxu0 0.0
    %1343 = vmatpush1.msra.mxu0 0.0
    %1344 = vmatprep.subr.mxu0 0.0
    %1345 = vmatpush1.msra.mxu0 0.0
    %1346 = vmatprep.subr.mxu0 0.0
    %1347 = vmatpush1.msra.mxu0 0.0
    %1348 = vmatprep.subr.mxu0 0.0
    %1349 = vmatpush1.msra.mxu0 0.0
    %1350 = vmatprep.subr.mxu0 0.0
    %1351 = vmatpush1.msra.mxu0 0.0
    %1352 = vmatprep.subr.mxu0 0.0
    %1353 = vmatpush1.msra.mxu0 0.0
    %1354 = vmatprep.subr.mxu0 0.0
    %1355 = vmatpush1.msra.mxu0 0.0
    %1356 = vmatprep.subr.mxu0 0.0
    %1357 = vmatpush1.msra.mxu0 0.0
    %1358 = vmatprep.subr.mxu0 0.0
    %1359 = vmatpush1.msra.mxu0 0.0
    %1360 = vmatprep.subr.mxu0 0.0
    %1361 = vmatpush1.msra.mxu0 0.0
    %1362 = vmatprep.subr.mxu0 0.0
    %1363 = vmatpush1.msra.mxu0 0.0
    %1364 = vmatprep.subr.mxu0 0.0
    %1365 = vmatpush1.msra.mxu0 0.0
    %1366 = vmatprep.subr.mxu0 0.0
    %1367 = vmatpush1.msra.mxu0 0.0
    %1368 = vmatprep.subr.mxu0 0.0
    %1369 = vmatpush1.msra.mxu0 0.0
    %1370 = vmatprep.subr.mxu0 0.0
    %1371 = vmatpush1.msra.mxu0 0.0
    %1372 = vmatprep.subr.mxu0 0.0
    %1373 = vmatpush1.msra.mxu0 0.0
    %1374 = vmatprep.subr.mxu0 0.0
    %1375 = vmatpush1.msra.mxu0 0.0
    %1376 = vmatprep.subr.mxu0 0.0
    %1377 = vmatpush1.msra.mxu0 0.0
    %1378 = vmatprep.subr.mxu0 0.0
    %1379 = vmatpush1.msra.mxu0 0.0
    %1380 = vmatprep.subr.mxu0 0.0
    %1381 = vmatpush1.msra.mxu0 0.0
    %1382 = vmatprep.subr.mxu0 0.0
    %1383 = vmatpush1.msra.mxu0 0.0
    %1384 = vmatprep.mubr.f32.mxu0 0.0
    %1385 = vmatmul.mubr.f32.gmra.mrb[0].mxu0 %v1225
    %v1386 = vpop.f32.mrb[0].mxu0
    %v1387 = vadd.f32 %v1223, %v1386
    %v1388 = vpop.f32.mrb[0].mxu0
    %1389 = vmatprep.mubr.f32.mxu0 0.0
    %1390 = vmatmul.mubr.f32.gmra.mrb[0].mxu0 %v1228
    %v1391 = vpop.f32.mrb[0].mxu0
    %v1392 = vadd.f32 %v1223, %v1391
    %v1393 = vpop.f32.mrb[0].mxu0
    %1394 = vmatprep.mubr.f32.mxu0 0.0
    %1395 = vmatmul.mubr.f32.gmra.mrb[0].mxu0 %v1231
    %v1396 = vpop.f32.mrb[0].mxu0
    %v1397 = vadd.f32 %v1223, %v1396
    %v1398 = vpop.f32.mrb[0].mxu0
    %1399 = vmatprep.mubr.f32.mxu0 0.0
    %1400 = vmatmul.mubr.f32.gmra.mrb[0].mxu0 %v1234
    %v1401 = vpop.f32.mrb[0].mxu0
    %v1402 = vadd.f32 %v1223, %v1401
    %v1403 = vpop.f32.mrb[0].mxu0
    %1404 = vmatprep.mubr.f32.mxu0 0.0
    %1405 = vmatmul.mubr.f32.gmra.mrb[0].mxu0 %v1237
    %v1406 = vpop.f32.mrb[0].mxu0
    %v1407 = vadd.f32 %v1223, %v1406
    %v1408 = vpop.f32.mrb[0].mxu0
    %1409 = vmatprep.mubr.f32.mxu0 0.0
    %1410 = vmatmul.mubr.f32.gmra.mrb[0].mxu0 %v1240
    %v1411 = vpop.f32.mrb[0].mxu0
    %v1412 = vadd.f32 %v1223, %v1411
    %v1413 = vpop.f32.mrb[0].mxu0
    %1414 = vmatprep.mubr.f32.mxu0 0.0
    %1415 = vmatmul.mubr.f32.gmra.mrb[0].mxu0 %v1243
    %v1416 = vpop.f32.mrb[0].mxu0
    %v1417 = vadd.f32 %v1223, %v1416
    %v1418 = vpop.f32.mrb[0].mxu0
    %1419 = vmatprep.mubr.f32.mxu0 0.0
    %1420 = vmatmul.mubr.f32.gmra.mrb[0].mxu0 %v1246
    %v1421 = vpop.f32.mrb[0].mxu0
    %v1422 = vadd.f32 %v1223, %v1421
    %v1423 = vpop.f32.mrb[0].mxu0
    %1424 = vmatprep.mubr.f32.mxu0 0.0
    %1425 = vmatmul.mubr.f32.gmra.mrb[0].mxu0 %v1249
    %v1426 = vpop.f32.mrb[0].mxu0
    %v1427 = vadd.f32 %v1223, %v1426
    %v1428 = vpop.f32.mrb[0].mxu0
    %1429 = vmatprep.mubr.f32.mxu0 0.0
    %1430 = vmatmul.mubr.f32.gmra.mrb[0].mxu0 %v1252
    %v1431 = vpop.f32.mrb[0].mxu0
    %v1432 = vadd.f32 %v1223, %v1431
    %v1433 = vpop.f32.mrb[0].mxu0
    %1434 = vmatprep.mubr.f32.mxu0 0.0
    %1435 = vmatmul.mubr.f32.gmra.mrb[0].mxu0 %v1255
    %v1436 = vpop.f32.mrb[0].mxu0
    %v1437 = vadd.f32 %v1223, %v1436
    %v1438 = vpop.f32.mrb[0].mxu0
    %1439 = vmatprep.mubr.f32.mxu0 0.0
    %1440 = vmatmul.mubr.f32.gmra.mrb[0].mxu0 %v1258
    %v1441 = vpop.f32.mrb[0].mxu0
    %v1442 = vadd.f32 %v1223, %v1441
    %v1443 = vpop.f32.mrb[0].mxu0
    %1444 = vmatprep.mubr.f32.mxu0 0.0
    %1445 = vmatmul.mubr.f32.gmra.mrb[0].mxu0 %v1261
    %v1446 = vpop.f32.mrb[0].mxu0
    %v1447 = vadd.f32 %v1223, %v1446
    %v1448 = vpop.f32.mrb[0].mxu0
    %1449 = vmatprep.mubr.f32.mxu0 0.0
    %1450 = vmatmul.mubr.f32.gmra.mrb[0].mxu0 %v1264
    %v1451 = vpop.f32.mrb[0].mxu0
    %v1452 = vadd.f32 %v1223, %v1451
    %v1453 = vpop.f32.mrb[0].mxu0
    %1454 = vmatprep.mubr.f32.mxu0 0.0
    %1455 = vmatmul.mubr.f32.gmra.mrb[0].mxu0 %v1267
    %v1456 = vpop.f32.mrb[0].mxu0
    %v1457 = vadd.f32 %v1223, %v1456
    %v1458 = vpop.f32.mrb[0].mxu0
    %1459 = vmatprep.mubr.f32.mxu0 0.0
    %1460 = vmatmul.mubr.f32.gmra.mrb[0].mxu0 %v1270
    %v1461 = vpop.f32.mrb[0].mxu0
    %v1462 = vadd.f32 %v1223, %v1461
    %v1463 = vpop.f32.mrb[0].mxu0
    %1464 = vmatprep.mubr.f32.mxu0 0.0
    %1465 = vmatmul.mubr.f32.gmra.mrb[0].mxu0 %v1273
    %v1466 = vpop.f32.mrb[0].mxu0
    %v1467 = vadd.f32 %v1223, %v1466
    %v1468 = vpop.f32.mrb[0].mxu0
    %1469 = vmatprep.mubr.f32.mxu0 0.0
    %1470 = vmatmul.mubr.f32.gmra.mrb[0].mxu0 %v1276
    %v1471 = vpop.f32.mrb[0].mxu0
    %v1472 = vadd.f32 %v1223, %v1471
    %v1473 = vpop.f32.mrb[0].mxu0
    %1474 = vmatprep.mubr.f32.mxu0 0.0
    %1475 = vmatmul.mubr.f32.gmra.mrb[0].mxu0 %v1279
    %v1476 = vpop.f32.mrb[0].mxu0
    %v1477 = vadd.f32 %v1223, %v1476
    %v1478 = vpop.f32.mrb[0].mxu0
    %1479 = vmatprep.mubr.f32.mxu0 0.0
    %1480 = vmatmul.mubr.f32.gmra.mrb[0].mxu0 %v1282
    %v1481 = vpop.f32.mrb[0].mxu0
    %v1482 = vadd.f32 %v1223, %v1481
    %v1483 = vpop.f32.mrb[0].mxu0
    %1484 = vmatprep.mubr.f32.mxu0 0.0
    %1485 = vmatmul.mubr.f32.gmra.mrb[0].mxu0 %v1285
    %v1486 = vpop.f32.mrb[0].mxu0
    %v1487 = vadd.f32 %v1223, %v1486
    %v1488 = vpop.f32.mrb[0].mxu0
    %1489 = vmatprep.mubr.f32.mxu0 0.0
    %1490 = vmatmul.mubr.f32.gmra.mrb[0].mxu0 %v1288
    %v1491 = vpop.f32.mrb[0].mxu0
    %v1492 = vadd.f32 %v1223, %v1491
    %v1493 = vpop.f32.mrb[0].mxu0
    %1494 = vmatprep.mubr.f32.mxu0 0.0
    %1495 = vmatmul.mubr.f32.gmra.mrb[0].mxu0 %v1291
    %v1496 = vpop.f32.mrb[0].mxu0
    %v1497 = vadd.f32 %v1223, %v1496
    %v1498 = vpop.f32.mrb[0].mxu0
    %1499 = vmatprep.mubr.f32.mxu0 0.0
    %1500 = vmatmul.mubr.f32.gmra.mrb[0].mxu0 %v1294
    %v1501 = vpop.f32.mrb[0].mxu0
    %v1502 = vadd.f32 %v1223, %v1501
    %v1503 = vpop.f32.mrb[0].mxu0
    %1504 = vmatprep.mubr.f32.mxu0 0.0
    %1505 = vmatmul.mubr.f32.gmra.mrb[0].mxu0 %v1297
    %v1506 = vpop.f32.mrb[0].mxu0
    %v1507 = vadd.f32 %v1223, %v1506
    %v1508 = vpop.f32.mrb[0].mxu0
    %1509 = vmatprep.mubr.f32.mxu0 0.0
    %1510 = vmatmul.mubr.f32.gmra.mrb[0].mxu0 %v1300
    %v1511 = vpop.f32.mrb[0].mxu0
    %v1512 = vadd.f32 %v1223, %v1511
    %v1513 = vpop.f32.mrb[0].mxu0
    %1514 = vmatprep.mubr.f32.mxu0 0.0
    %1515 = vmatmul.mubr.f32.gmra.mrb[0].mxu0 %v1303
    %v1516 = vpop.f32.mrb[0].mxu0
    %v1517 = vadd.f32 %v1223, %v1516
    %v1518 = vpop.f32.mrb[0].mxu0
    %1519 = vmatprep.mubr.f32.mxu0 0.0
    %1520 = vmatmul.mubr.f32.gmra.mrb[0].mxu0 %v1306
    %v1521 = vpop.f32.mrb[0].mxu0
    %v1522 = vadd.f32 %v1223, %v1521
    %v1523 = vpop.f32.mrb[0].mxu0
    %1524 = vmatprep.mubr.f32.mxu0 0.0
    %1525 = vmatmul.mubr.f32.gmra.mrb[0].mxu0 %v1309
    %v1526 = vpop.f32.mrb[0].mxu0
    %v1527 = vadd.f32 %v1223, %v1526
    %v1528 = vpop.f32.mrb[0].mxu0
    %1529 = vmatprep.mubr.f32.mxu0 0.0
    %1530 = vmatmul.mubr.f32.gmra.mrb[0].mxu0 %v1312
    %v1531 = vpop.f32.mrb[0].mxu0
    %v1532 = vadd.f32 %v1223, %v1531
    %v1533 = vpop.f32.mrb[0].mxu0
    %1534 = vmatprep.mubr.f32.mxu0 0.0
    %1535 = vmatmul.mubr.f32.gmra.mrb[0].mxu0 %v1315
    %v1536 = vpop.f32.mrb[0].mxu0
    %v1537 = vadd.f32 %v1223, %v1536
    %v1538 = vpop.f32.mrb[0].mxu0
    %1539 = vmatprep.mubr.f32.mxu0 0.0
    %1540 = vmatmul.mubr.f32.gmra.mrb[0].mxu0 %v1318
    %v1541 = vpop.f32.mrb[0].mxu0
    %v1542 = vadd.f32 %v1223, %v1541
    %v1543 = vpop.f32.mrb[0].mxu0
    %1544 = vdwg.mxu0
    %v1545 = vmul.f32 %v1387, 0.17677669
    %v1546 = vmul.f32 %v1392, 0.17677669
    %v1547 = vmul.f32 %v1397, 0.17677669
    %v1548 = vmul.f32 %v1402, 0.17677669
    %v1549 = vmul.f32 %v1407, 0.17677669
    %v1550 = vmul.f32 %v1412, 0.17677669
    %v1551 = vmul.f32 %v1417, 0.17677669
    %v1552 = vmul.f32 %v1422, 0.17677669
    %v1553 = vmul.f32 %v1427, 0.17677669
    %v1554 = vmul.f32 %v1432, 0.17677669
    %v1555 = vmul.f32 %v1437, 0.17677669
    %v1556 = vmul.f32 %v1442, 0.17677669
    %v1557 = vmul.f32 %v1447, 0.17677669
    %v1558 = vmul.f32 %v1452, 0.17677669
    %v1559 = vmul.f32 %v1457, 0.17677669
    %v1560 = vmul.f32 %v1462, 0.17677669
    %v1561 = vmul.f32 %v1467, 0.17677669
    %v1562 = vmul.f32 %v1472, 0.17677669
    %v1563 = vmul.f32 %v1477, 0.17677669
    %v1564 = vmul.f32 %v1482, 0.17677669
    %v1565 = vmul.f32 %v1487, 0.17677669
    %v1566 = vmul.f32 %v1492, 0.17677669
    %v1567 = vmul.f32 %v1497, 0.17677669
    %v1568 = vmul.f32 %v1502, 0.17677669
    %v1569 = vmul.f32 %v1507, 0.17677669
    %v1570 = vmul.f32 %v1512, 0.17677669
    %v1571 = vmul.f32 %v1517, 0.17677669
    %v1572 = vmul.f32 %v1522, 0.17677669
    %v1573 = vmul.f32 %v1527, 0.17677669
    %v1574 = vmul.f32 %v1532, 0.17677669
    %v1575 = vmul.f32 %v1537, 0.17677669
    %v1576 = vmul.f32 %v1542, 0.17677669
    %v1577 = vsel %vm541, %v1545, -inf
    %v1578 = vrot.slane %v1577, 4
    %v1579 = vmax.f32 %v1577, %v1578
    %v1580 = vrot.slane %v1579, 2
    %v1581 = vmax.f32 %v1579, %v1580
    %v1582 = vrot.slane %v1581, 1
    %v1583 = vmax.f32 %v1581, %v1582
    %v1584 = vsel %vm541, %v1546, -inf
    %v1585 = vrot.slane %v1584, 4
    %v1586 = vmax.f32 %v1584, %v1585
    %v1587 = vrot.slane %v1586, 2
    %v1588 = vmax.f32 %v1586, %v1587
    %v1589 = vrot.slane %v1588, 1
    %v1590 = vmax.f32 %v1588, %v1589
    %v1591 = vsel %vm541, %v1547, -inf
    %v1592 = vrot.slane %v1591, 4
    %v1593 = vmax.f32 %v1591, %v1592
    %v1594 = vrot.slane %v1593, 2
    %v1595 = vmax.f32 %v1593, %v1594
    %v1596 = vrot.slane %v1595, 1
    %v1597 = vmax.f32 %v1595, %v1596
    %v1598 = vsel %vm541, %v1548, -inf
    %v1599 = vrot.slane %v1598, 4
    %v1600 = vmax.f32 %v1598, %v1599
    %v1601 = vrot.slane %v1600, 2
    %v1602 = vmax.f32 %v1600, %v1601
    %v1603 = vrot.slane %v1602, 1
    %v1604 = vmax.f32 %v1602, %v1603
    %v1605 = vsel %vm541, %v1549, -inf
    %v1606 = vrot.slane %v1605, 4
    %v1607 = vmax.f32 %v1605, %v1606
    %v1608 = vrot.slane %v1607, 2
    %v1609 = vmax.f32 %v1607, %v1608
    %v1610 = vrot.slane %v1609, 1
    %v1611 = vmax.f32 %v1609, %v1610
    %v1612 = vsel %vm541, %v1550, -inf
    %v1613 = vrot.slane %v1612, 4
    %v1614 = vmax.f32 %v1612, %v1613
    %v1615 = vrot.slane %v1614, 2
    %v1616 = vmax.f32 %v1614, %v1615
    %v1617 = vrot.slane %v1616, 1
    %v1618 = vmax.f32 %v1616, %v1617
    %v1619 = vsel %vm541, %v1551, -inf
    %v1620 = vrot.slane %v1619, 4
    %v1621 = vmax.f32 %v1619, %v1620
    %v1622 = vrot.slane %v1621, 2
    %v1623 = vmax.f32 %v1621, %v1622
    %v1624 = vrot.slane %v1623, 1
    %v1625 = vmax.f32 %v1623, %v1624
    %v1626 = vsel %vm541, %v1552, -inf
    %v1627 = vrot.slane %v1626, 4
    %v1628 = vmax.f32 %v1626, %v1627
    %v1629 = vrot.slane %v1628, 2
    %v1630 = vmax.f32 %v1628, %v1629
    %v1631 = vrot.slane %v1630, 1
    %v1632 = vmax.f32 %v1630, %v1631
    %v1633 = vsel %vm541, %v1553, -inf
    %v1634 = vrot.slane %v1633, 4
    %v1635 = vmax.f32 %v1633, %v1634
    %v1636 = vrot.slane %v1635, 2
    %v1637 = vmax.f32 %v1635, %v1636
    %v1638 = vrot.slane %v1637, 1
    %v1639 = vmax.f32 %v1637, %v1638
    %v1640 = vsel %vm541, %v1554, -inf
    %v1641 = vrot.slane %v1640, 4
    %v1642 = vmax.f32 %v1640, %v1641
    %v1643 = vrot.slane %v1642, 2
    %v1644 = vmax.f32 %v1642, %v1643
    %v1645 = vrot.slane %v1644, 1
    %v1646 = vmax.f32 %v1644, %v1645
    %v1647 = vsel %vm541, %v1555, -inf
    %v1648 = vrot.slane %v1647, 4
    %v1649 = vmax.f32 %v1647, %v1648
    %v1650 = vrot.slane %v1649, 2
    %v1651 = vmax.f32 %v1649, %v1650
    %v1652 = vrot.slane %v1651, 1
    %v1653 = vmax.f32 %v1651, %v1652
    %v1654 = vsel %vm541, %v1556, -inf
    %v1655 = vrot.slane %v1654, 4
    %v1656 = vmax.f32 %v1654, %v1655
    %v1657 = vrot.slane %v1656, 2
    %v1658 = vmax.f32 %v1656, %v1657
    %v1659 = vrot.slane %v1658, 1
    %v1660 = vmax.f32 %v1658, %v1659
    %v1661 = vsel %vm541, %v1557, -inf
    %v1662 = vrot.slane %v1661, 4
    %v1663 = vmax.f32 %v1661, %v1662
    %v1664 = vrot.slane %v1663, 2
    %v1665 = vmax.f32 %v1663, %v1664
    %v1666 = vrot.slane %v1665, 1
    %v1667 = vmax.f32 %v1665, %v1666
    %v1668 = vsel %vm541, %v1558, -inf
    %v1669 = vrot.slane %v1668, 4
    %v1670 = vmax.f32 %v1668, %v1669
    %v1671 = vrot.slane %v1670, 2
    %v1672 = vmax.f32 %v1670, %v1671
    %v1673 = vrot.slane %v1672, 1
    %v1674 = vmax.f32 %v1672, %v1673
    %v1675 = vsel %vm541, %v1559, -inf
    %v1676 = vrot.slane %v1675, 4
    %v1677 = vmax.f32 %v1675, %v1676
    %v1678 = vrot.slane %v1677, 2
    %v1679 = vmax.f32 %v1677, %v1678
    %v1680 = vrot.slane %v1679, 1
    %v1681 = vmax.f32 %v1679, %v1680
    %v1682 = vsel %vm541, %v1560, -inf
    %v1683 = vrot.slane %v1682, 4
    %v1684 = vmax.f32 %v1682, %v1683
    %v1685 = vrot.slane %v1684, 2
    %v1686 = vmax.f32 %v1684, %v1685
    %v1687 = vrot.slane %v1686, 1
    %v1688 = vmax.f32 %v1686, %v1687
    %v1689 = vsel %vm541, %v1561, -inf
    %v1690 = vrot.slane %v1689, 4
    %v1691 = vmax.f32 %v1689, %v1690
    %v1692 = vrot.slane %v1691, 2
    %v1693 = vmax.f32 %v1691, %v1692
    %v1694 = vrot.slane %v1693, 1
    %v1695 = vmax.f32 %v1693, %v1694
    %v1696 = vsel %vm541, %v1562, -inf
    %v1697 = vrot.slane %v1696, 4
    %v1698 = vmax.f32 %v1696, %v1697
    %v1699 = vrot.slane %v1698, 2
    %v1700 = vmax.f32 %v1698, %v1699
    %v1701 = vrot.slane %v1700, 1
    %v1702 = vmax.f32 %v1700, %v1701
    %v1703 = vsel %vm541, %v1563, -inf
    %v1704 = vrot.slane %v1703, 4
    %v1705 = vmax.f32 %v1703, %v1704
    %v1706 = vrot.slane %v1705, 2
    %v1707 = vmax.f32 %v1705, %v1706
    %v1708 = vrot.slane %v1707, 1
    %v1709 = vmax.f32 %v1707, %v1708
    %v1710 = vsel %vm541, %v1564, -inf
    %v1711 = vrot.slane %v1710, 4
    %v1712 = vmax.f32 %v1710, %v1711
    %v1713 = vrot.slane %v1712, 2
    %v1714 = vmax.f32 %v1712, %v1713
    %v1715 = vrot.slane %v1714, 1
    %v1716 = vmax.f32 %v1714, %v1715
    %v1717 = vsel %vm541, %v1565, -inf
    %v1718 = vrot.slane %v1717, 4
    %v1719 = vmax.f32 %v1717, %v1718
    %v1720 = vrot.slane %v1719, 2
    %v1721 = vmax.f32 %v1719, %v1720
    %v1722 = vrot.slane %v1721, 1
    %v1723 = vmax.f32 %v1721, %v1722
    %v1724 = vsel %vm541, %v1566, -inf
    %v1725 = vrot.slane %v1724, 4
    %v1726 = vmax.f32 %v1724, %v1725
    %v1727 = vrot.slane %v1726, 2
    %v1728 = vmax.f32 %v1726, %v1727
    %v1729 = vrot.slane %v1728, 1
    %v1730 = vmax.f32 %v1728, %v1729
    %v1731 = vsel %vm541, %v1567, -inf
    %v1732 = vrot.slane %v1731, 4
    %v1733 = vmax.f32 %v1731, %v1732
    %v1734 = vrot.slane %v1733, 2
    %v1735 = vmax.f32 %v1733, %v1734
    %v1736 = vrot.slane %v1735, 1
    %v1737 = vmax.f32 %v1735, %v1736
    %v1738 = vsel %vm541, %v1568, -inf
    %v1739 = vrot.slane %v1738, 4
    %v1740 = vmax.f32 %v1738, %v1739
    %v1741 = vrot.slane %v1740, 2
    %v1742 = vmax.f32 %v1740, %v1741
    %v1743 = vrot.slane %v1742, 1
    %v1744 = vmax.f32 %v1742, %v1743
    %v1745 = vsel %vm541, %v1569, -inf
    %v1746 = vrot.slane %v1745, 4
    %v1747 = vmax.f32 %v1745, %v1746
    %v1748 = vrot.slane %v1747, 2
    %v1749 = vmax.f32 %v1747, %v1748
    %v1750 = vrot.slane %v1749, 1
    %v1751 = vmax.f32 %v1749, %v1750
    %v1752 = vsel %vm541, %v1570, -inf
    %v1753 = vrot.slane %v1752, 4
    %v1754 = vmax.f32 %v1752, %v1753
    %v1755 = vrot.slane %v1754, 2
    %v1756 = vmax.f32 %v1754, %v1755
    %v1757 = vrot.slane %v1756, 1
    %v1758 = vmax.f32 %v1756, %v1757
    %v1759 = vsel %vm541, %v1571, -inf
    %v1760 = vrot.slane %v1759, 4
    %v1761 = vmax.f32 %v1759, %v1760
    %v1762 = vrot.slane %v1761, 2
    %v1763 = vmax.f32 %v1761, %v1762
    %v1764 = vrot.slane %v1763, 1
    %v1765 = vmax.f32 %v1763, %v1764
    %v1766 = vsel %vm541, %v1572, -inf
    %v1767 = vrot.slane %v1766, 4
    %v1768 = vmax.f32 %v1766, %v1767
    %v1769 = vrot.slane %v1768, 2
    %v1770 = vmax.f32 %v1768, %v1769
    %v1771 = vrot.slane %v1770, 1
    %v1772 = vmax.f32 %v1770, %v1771
    %v1773 = vsel %vm541, %v1573, -inf
    %v1774 = vrot.slane %v1773, 4
    %v1775 = vmax.f32 %v1773, %v1774
    %v1776 = vrot.slane %v1775, 2
    %v1777 = vmax.f32 %v1775, %v1776
    %v1778 = vrot.slane %v1777, 1
    %v1779 = vmax.f32 %v1777, %v1778
    %v1780 = vsel %vm541, %v1574, -inf
    %v1781 = vrot.slane %v1780, 4
    %v1782 = vmax.f32 %v1780, %v1781
    %v1783 = vrot.slane %v1782, 2
    %v1784 = vmax.f32 %v1782, %v1783
    %v1785 = vrot.slane %v1784, 1
    %v1786 = vmax.f32 %v1784, %v1785
    %v1787 = vsel %vm541, %v1575, -inf
    %v1788 = vrot.slane %v1787, 4
    %v1789 = vmax.f32 %v1787, %v1788
    %v1790 = vrot.slane %v1789, 2
    %v1791 = vmax.f32 %v1789, %v1790
    %v1792 = vrot.slane %v1791, 1
    %v1793 = vmax.f32 %v1791, %v1792
    %v1794 = vsel %vm541, %v1576, -inf
    %v1795 = vrot.slane %v1794, 4
    %v1796 = vmax.f32 %v1794, %v1795
    %v1797 = vrot.slane %v1796, 2
    %v1798 = vmax.f32 %v1796, %v1797
    %v1799 = vrot.slane %v1798, 1
    %v1800 = vmax.f32 %v1798, %v1799
    %v1801 = vsub.f32 %v1545, %v1583
    %v1802 = vsub.f32 %v1546, %v1590
    %v1803 = vsub.f32 %v1547, %v1597
    %v1804 = vsub.f32 %v1548, %v1604
    %v1805 = vsub.f32 %v1549, %v1611
    %v1806 = vsub.f32 %v1550, %v1618
    %v1807 = vsub.f32 %v1551, %v1625
    %v1808 = vsub.f32 %v1552, %v1632
    %v1809 = vsub.f32 %v1553, %v1639
    %v1810 = vsub.f32 %v1554, %v1646
    %v1811 = vsub.f32 %v1555, %v1653
    %v1812 = vsub.f32 %v1556, %v1660
    %v1813 = vsub.f32 %v1557, %v1667
    %v1814 = vsub.f32 %v1558, %v1674
    %v1815 = vsub.f32 %v1559, %v1681
    %v1816 = vsub.f32 %v1560, %v1688
    %v1817 = vsub.f32 %v1561, %v1695
    %v1818 = vsub.f32 %v1562, %v1702
    %v1819 = vsub.f32 %v1563, %v1709
    %v1820 = vsub.f32 %v1564, %v1716
    %v1821 = vsub.f32 %v1565, %v1723
    %v1822 = vsub.f32 %v1566, %v1730
    %v1823 = vsub.f32 %v1567, %v1737
    %v1824 = vsub.f32 %v1568, %v1744
    %v1825 = vsub.f32 %v1569, %v1751
    %v1826 = vsub.f32 %v1570, %v1758
    %v1827 = vsub.f32 %v1571, %v1765
    %v1828 = vsub.f32 %v1572, %v1772
    %v1829 = vsub.f32 %v1573, %v1779
    %v1830 = vsub.f32 %v1574, %v1786
    %v1831 = vsub.f32 %v1575, %v1793
    %v1832 = vsub.f32 %v1576, %v1800
    %v1833 = vmul.f32 %v1801, 1.442695
    %v1834 = vpow.pop %v1833
    %v1835 = vmul.f32 %v1802, 1.442695
    %v1836 = vpow.pop %v1835
    %v1837 = vmul.f32 %v1803, 1.442695
    %v1838 = vpow.pop %v1837
    %v1839 = vmul.f32 %v1804, 1.442695
    %v1840 = vpow.pop %v1839
    %v1841 = vmul.f32 %v1805, 1.442695
    %v1842 = vpow.pop %v1841
    %v1843 = vmul.f32 %v1806, 1.442695
    %v1844 = vpow.pop %v1843
    %v1845 = vmul.f32 %v1807, 1.442695
    %v1846 = vpow.pop %v1845
    %v1847 = vmul.f32 %v1808, 1.442695
    %v1848 = vpow.pop %v1847
    %v1849 = vmul.f32 %v1809, 1.442695
    %v1850 = vpow.pop %v1849
    %v1851 = vmul.f32 %v1810, 1.442695
    %v1852 = vpow.pop %v1851
    %v1853 = vmul.f32 %v1811, 1.442695
    %v1854 = vpow.pop %v1853
    %v1855 = vmul.f32 %v1812, 1.442695
    %v1856 = vpow.pop %v1855
    %v1857 = vmul.f32 %v1813, 1.442695
    %v1858 = vpow.pop %v1857
    %v1859 = vmul.f32 %v1814, 1.442695
    %v1860 = vpow.pop %v1859
    %v1861 = vmul.f32 %v1815, 1.442695
    %v1862 = vpow.pop %v1861
    %v1863 = vmul.f32 %v1816, 1.442695
    %v1864 = vpow.pop %v1863
    %v1865 = vmul.f32 %v1817, 1.442695
    %v1866 = vpow.pop %v1865
    %v1867 = vmul.f32 %v1818, 1.442695
    %v1868 = vpow.pop %v1867
    %v1869 = vmul.f32 %v1819, 1.442695
    %v1870 = vpow.pop %v1869
    %v1871 = vmul.f32 %v1820, 1.442695
    %v1872 = vpow.pop %v1871
    %v1873 = vmul.f32 %v1821, 1.442695
    %v1874 = vpow.pop %v1873
    %v1875 = vmul.f32 %v1822, 1.442695
    %v1876 = vpow.pop %v1875
    %v1877 = vmul.f32 %v1823, 1.442695
    %v1878 = vpow.pop %v1877
    %v1879 = vmul.f32 %v1824, 1.442695
    %v1880 = vpow.pop %v1879
    %v1881 = vmul.f32 %v1825, 1.442695
    %v1882 = vpow.pop %v1881
    %v1883 = vmul.f32 %v1826, 1.442695
    %v1884 = vpow.pop %v1883
    %v1885 = vmul.f32 %v1827, 1.442695
    %v1886 = vpow.pop %v1885
    %v1887 = vmul.f32 %v1828, 1.442695
    %v1888 = vpow.pop %v1887
    %v1889 = vmul.f32 %v1829, 1.442695
    %v1890 = vpow.pop %v1889
    %v1891 = vmul.f32 %v1830, 1.442695
    %v1892 = vpow.pop %v1891
    %v1893 = vmul.f32 %v1831, 1.442695
    %v1894 = vpow.pop %v1893
    %v1895 = vmul.f32 %v1832, 1.442695
    %v1896 = vpow.pop %v1895
    %v1897 = vsel %vm541, %v1834, 0.0
    %v1898 = vrot.slane %v1897, 4
    %v1899 = vadd.f32 %v1897, %v1898
    %v1900 = vrot.slane %v1899, 2
    %v1901 = vadd.f32 %v1899, %v1900
    %v1902 = vrot.slane %v1901, 1
    %v1903 = vadd.f32 %v1901, %v1902
    %v1904 = vsel %vm541, %v1836, 0.0
    %v1905 = vrot.slane %v1904, 4
    %v1906 = vadd.f32 %v1904, %v1905
    %v1907 = vrot.slane %v1906, 2
    %v1908 = vadd.f32 %v1906, %v1907
    %v1909 = vrot.slane %v1908, 1
    %v1910 = vadd.f32 %v1908, %v1909
    %v1911 = vsel %vm541, %v1838, 0.0
    %v1912 = vrot.slane %v1911, 4
    %v1913 = vadd.f32 %v1911, %v1912
    %v1914 = vrot.slane %v1913, 2
    %v1915 = vadd.f32 %v1913, %v1914
    %v1916 = vrot.slane %v1915, 1
    %v1917 = vadd.f32 %v1915, %v1916
    %v1918 = vsel %vm541, %v1840, 0.0
    %v1919 = vrot.slane %v1918, 4
    %v1920 = vadd.f32 %v1918, %v1919
    %v1921 = vrot.slane %v1920, 2
    %v1922 = vadd.f32 %v1920, %v1921
    %v1923 = vrot.slane %v1922, 1
    %v1924 = vadd.f32 %v1922, %v1923
    %v1925 = vsel %vm541, %v1842, 0.0
    %v1926 = vrot.slane %v1925, 4
    %v1927 = vadd.f32 %v1925, %v1926
    %v1928 = vrot.slane %v1927, 2
    %v1929 = vadd.f32 %v1927, %v1928
    %v1930 = vrot.slane %v1929, 1
    %v1931 = vadd.f32 %v1929, %v1930
    %v1932 = vsel %vm541, %v1844, 0.0
    %v1933 = vrot.slane %v1932, 4
    %v1934 = vadd.f32 %v1932, %v1933
    %v1935 = vrot.slane %v1934, 2
    %v1936 = vadd.f32 %v1934, %v1935
    %v1937 = vrot.slane %v1936, 1
    %v1938 = vadd.f32 %v1936, %v1937
    %v1939 = vsel %vm541, %v1846, 0.0
    %v1940 = vrot.slane %v1939, 4
    %v1941 = vadd.f32 %v1939, %v1940
    %v1942 = vrot.slane %v1941, 2
    %v1943 = vadd.f32 %v1941, %v1942
    %v1944 = vrot.slane %v1943, 1
    %v1945 = vadd.f32 %v1943, %v1944
    %v1946 = vsel %vm541, %v1848, 0.0
    %v1947 = vrot.slane %v1946, 4
    %v1948 = vadd.f32 %v1946, %v1947
    %v1949 = vrot.slane %v1948, 2
    %v1950 = vadd.f32 %v1948, %v1949
    %v1951 = vrot.slane %v1950, 1
    %v1952 = vadd.f32 %v1950, %v1951
    %v1953 = vsel %vm541, %v1850, 0.0
    %v1954 = vrot.slane %v1953, 4
    %v1955 = vadd.f32 %v1953, %v1954
    %v1956 = vrot.slane %v1955, 2
    %v1957 = vadd.f32 %v1955, %v1956
    %v1958 = vrot.slane %v1957, 1
    %v1959 = vadd.f32 %v1957, %v1958
    %v1960 = vsel %vm541, %v1852, 0.0
    %v1961 = vrot.slane %v1960, 4
    %v1962 = vadd.f32 %v1960, %v1961
    %v1963 = vrot.slane %v1962, 2
    %v1964 = vadd.f32 %v1962, %v1963
    %v1965 = vrot.slane %v1964, 1
    %v1966 = vadd.f32 %v1964, %v1965
    %v1967 = vsel %vm541, %v1854, 0.0
    %v1968 = vrot.slane %v1967, 4
    %v1969 = vadd.f32 %v1967, %v1968
    %v1970 = vrot.slane %v1969, 2
    %v1971 = vadd.f32 %v1969, %v1970
    %v1972 = vrot.slane %v1971, 1
    %v1973 = vadd.f32 %v1971, %v1972
    %v1974 = vsel %vm541, %v1856, 0.0
    %v1975 = vrot.slane %v1974, 4
    %v1976 = vadd.f32 %v1974, %v1975
    %v1977 = vrot.slane %v1976, 2
    %v1978 = vadd.f32 %v1976, %v1977
    %v1979 = vrot.slane %v1978, 1
    %v1980 = vadd.f32 %v1978, %v1979
    %v1981 = vsel %vm541, %v1858, 0.0
    %v1982 = vrot.slane %v1981, 4
    %v1983 = vadd.f32 %v1981, %v1982
    %v1984 = vrot.slane %v1983, 2
    %v1985 = vadd.f32 %v1983, %v1984
    %v1986 = vrot.slane %v1985, 1
    %v1987 = vadd.f32 %v1985, %v1986
    %v1988 = vsel %vm541, %v1860, 0.0
    %v1989 = vrot.slane %v1988, 4
    %v1990 = vadd.f32 %v1988, %v1989
    %v1991 = vrot.slane %v1990, 2
    %v1992 = vadd.f32 %v1990, %v1991
    %v1993 = vrot.slane %v1992, 1
    %v1994 = vadd.f32 %v1992, %v1993
    %v1995 = vsel %vm541, %v1862, 0.0
    %v1996 = vrot.slane %v1995, 4
    %v1997 = vadd.f32 %v1995, %v1996
    %v1998 = vrot.slane %v1997, 2
    %v1999 = vadd.f32 %v1997, %v1998
    %v2000 = vrot.slane %v1999, 1
    %v2001 = vadd.f32 %v1999, %v2000
    %v2002 = vsel %vm541, %v1864, 0.0
    %v2003 = vrot.slane %v2002, 4
    %v2004 = vadd.f32 %v2002, %v2003
    %v2005 = vrot.slane %v2004, 2
    %v2006 = vadd.f32 %v2004, %v2005
    %v2007 = vrot.slane %v2006, 1
    %v2008 = vadd.f32 %v2006, %v2007
    %v2009 = vsel %vm541, %v1866, 0.0
    %v2010 = vrot.slane %v2009, 4
    %v2011 = vadd.f32 %v2009, %v2010
    %v2012 = vrot.slane %v2011, 2
    %v2013 = vadd.f32 %v2011, %v2012
    %v2014 = vrot.slane %v2013, 1
    %v2015 = vadd.f32 %v2013, %v2014
    %v2016 = vsel %vm541, %v1868, 0.0
    %v2017 = vrot.slane %v2016, 4
    %v2018 = vadd.f32 %v2016, %v2017
    %v2019 = vrot.slane %v2018, 2
    %v2020 = vadd.f32 %v2018, %v2019
    %v2021 = vrot.slane %v2020, 1
    %v2022 = vadd.f32 %v2020, %v2021
    %v2023 = vsel %vm541, %v1870, 0.0
    %v2024 = vrot.slane %v2023, 4
    %v2025 = vadd.f32 %v2023, %v2024
    %v2026 = vrot.slane %v2025, 2
    %v2027 = vadd.f32 %v2025, %v2026
    %v2028 = vrot.slane %v2027, 1
    %v2029 = vadd.f32 %v2027, %v2028
    %v2030 = vsel %vm541, %v1872, 0.0
    %v2031 = vrot.slane %v2030, 4
    %v2032 = vadd.f32 %v2030, %v2031
    %v2033 = vrot.slane %v2032, 2
    %v2034 = vadd.f32 %v2032, %v2033
    %v2035 = vrot.slane %v2034, 1
    %v2036 = vadd.f32 %v2034, %v2035
    %v2037 = vsel %vm541, %v1874, 0.0
    %v2038 = vrot.slane %v2037, 4
    %v2039 = vadd.f32 %v2037, %v2038
    %v2040 = vrot.slane %v2039, 2
    %v2041 = vadd.f32 %v2039, %v2040
    %v2042 = vrot.slane %v2041, 1
    %v2043 = vadd.f32 %v2041, %v2042
    %v2044 = vsel %vm541, %v1876, 0.0
    %v2045 = vrot.slane %v2044, 4
    %v2046 = vadd.f32 %v2044, %v2045
    %v2047 = vrot.slane %v2046, 2
    %v2048 = vadd.f32 %v2046, %v2047
    %v2049 = vrot.slane %v2048, 1
    %v2050 = vadd.f32 %v2048, %v2049
    %v2051 = vsel %vm541, %v1878, 0.0
    %v2052 = vrot.slane %v2051, 4
    %v2053 = vadd.f32 %v2051, %v2052
    %v2054 = vrot.slane %v2053, 2
    %v2055 = vadd.f32 %v2053, %v2054
    %v2056 = vrot.slane %v2055, 1
    %v2057 = vadd.f32 %v2055, %v2056
    %v2058 = vsel %vm541, %v1880, 0.0
    %v2059 = vrot.slane %v2058, 4
    %v2060 = vadd.f32 %v2058, %v2059
    %v2061 = vrot.slane %v2060, 2
    %v2062 = vadd.f32 %v2060, %v2061
    %v2063 = vrot.slane %v2062, 1
    %v2064 = vadd.f32 %v2062, %v2063
    %v2065 = vsel %vm541, %v1882, 0.0
    %v2066 = vrot.slane %v2065, 4
    %v2067 = vadd.f32 %v2065, %v2066
    %v2068 = vrot.slane %v2067, 2
    %v2069 = vadd.f32 %v2067, %v2068
    %v2070 = vrot.slane %v2069, 1
    %v2071 = vadd.f32 %v2069, %v2070
    %v2072 = vsel %vm541, %v1884, 0.0
    %v2073 = vrot.slane %v2072, 4
    %v2074 = vadd.f32 %v2072, %v2073
    %v2075 = vrot.slane %v2074, 2
    %v2076 = vadd.f32 %v2074, %v2075
    %v2077 = vrot.slane %v2076, 1
    %v2078 = vadd.f32 %v2076, %v2077
    %v2079 = vsel %vm541, %v1886, 0.0
    %v2080 = vrot.slane %v2079, 4
    %v2081 = vadd.f32 %v2079, %v2080
    %v2082 = vrot.slane %v2081, 2
    %v2083 = vadd.f32 %v2081, %v2082
    %v2084 = vrot.slane %v2083, 1
    %v2085 = vadd.f32 %v2083, %v2084
    %v2086 = vsel %vm541, %v1888, 0.0
    %v2087 = vrot.slane %v2086, 4
    %v2088 = vadd.f32 %v2086, %v2087
    %v2089 = vrot.slane %v2088, 2
    %v2090 = vadd.f32 %v2088, %v2089
    %v2091 = vrot.slane %v2090, 1
    %v2092 = vadd.f32 %v2090, %v2091
    %v2093 = vsel %vm541, %v1890, 0.0
    %v2094 = vrot.slane %v2093, 4
    %v2095 = vadd.f32 %v2093, %v2094
    %v2096 = vrot.slane %v2095, 2
    %v2097 = vadd.f32 %v2095, %v2096
    %v2098 = vrot.slane %v2097, 1
    %v2099 = vadd.f32 %v2097, %v2098
    %v2100 = vsel %vm541, %v1892, 0.0
    %v2101 = vrot.slane %v2100, 4
    %v2102 = vadd.f32 %v2100, %v2101
    %v2103 = vrot.slane %v2102, 2
    %v2104 = vadd.f32 %v2102, %v2103
    %v2105 = vrot.slane %v2104, 1
    %v2106 = vadd.f32 %v2104, %v2105
    %v2107 = vsel %vm541, %v1894, 0.0
    %v2108 = vrot.slane %v2107, 4
    %v2109 = vadd.f32 %v2107, %v2108
    %v2110 = vrot.slane %v2109, 2
    %v2111 = vadd.f32 %v2109, %v2110
    %v2112 = vrot.slane %v2111, 1
    %v2113 = vadd.f32 %v2111, %v2112
    %v2114 = vsel %vm541, %v1896, 0.0
    %v2115 = vrot.slane %v2114, 4
    %v2116 = vadd.f32 %v2114, %v2115
    %v2117 = vrot.slane %v2116, 2
    %v2118 = vadd.f32 %v2116, %v2117
    %v2119 = vrot.slane %v2118, 1
    %v2120 = vadd.f32 %v2118, %v2119
    %v2121 = vrcp.pop %v1903
    %v2122 = vrcp.pop %v1910
    %v2123 = vrcp.pop %v1917
    %v2124 = vrcp.pop %v1924
    %v2125 = vrcp.pop %v1931
    %v2126 = vrcp.pop %v1938
    %v2127 = vrcp.pop %v1945
    %v2128 = vrcp.pop %v1952
    %v2129 = vrcp.pop %v1959
    %v2130 = vrcp.pop %v1966
    %v2131 = vrcp.pop %v1973
    %v2132 = vrcp.pop %v1980
    %v2133 = vrcp.pop %v1987
    %v2134 = vrcp.pop %v1994
    %v2135 = vrcp.pop %v2001
    %v2136 = vrcp.pop %v2008
    %v2137 = vrcp.pop %v2015
    %v2138 = vrcp.pop %v2022
    %v2139 = vrcp.pop %v2029
    %v2140 = vrcp.pop %v2036
    %v2141 = vrcp.pop %v2043
    %v2142 = vrcp.pop %v2050
    %v2143 = vrcp.pop %v2057
    %v2144 = vrcp.pop %v2064
    %v2145 = vrcp.pop %v2071
    %v2146 = vrcp.pop %v2078
    %v2147 = vrcp.pop %v2085
    %v2148 = vrcp.pop %v2092
    %v2149 = vrcp.pop %v2099
    %v2150 = vrcp.pop %v2106
    %v2151 = vrcp.pop %v2113
    %v2152 = vrcp.pop %v2120
    %v2153 = vmul.f32 %v1834, %v2121
    %v2154 = vmul.f32 %v1836, %v2122
    %v2155 = vmul.f32 %v1838, %v2123
    %v2156 = vmul.f32 %v1840, %v2124
    %v2157 = vmul.f32 %v1842, %v2125
    %v2158 = vmul.f32 %v1844, %v2126
    %v2159 = vmul.f32 %v1846, %v2127
    %v2160 = vmul.f32 %v1848, %v2128
    %v2161 = vmul.f32 %v1850, %v2129
    %v2162 = vmul.f32 %v1852, %v2130
    %v2163 = vmul.f32 %v1854, %v2131
    %v2164 = vmul.f32 %v1856, %v2132
    %v2165 = vmul.f32 %v1858, %v2133
    %v2166 = vmul.f32 %v1860, %v2134
    %v2167 = vmul.f32 %v1862, %v2135
    %v2168 = vmul.f32 %v1864, %v2136
    %v2169 = vmul.f32 %v1866, %v2137
    %v2170 = vmul.f32 %v1868, %v2138
    %v2171 = vmul.f32 %v1870, %v2139
    %v2172 = vmul.f32 %v1872, %v2140
    %v2173 = vmul.f32 %v1874, %v2141
    %v2174 = vmul.f32 %v1876, %v2142
    %v2175 = vmul.f32 %v1878, %v2143
    %v2176 = vmul.f32 %v1880, %v2144
    %v2177 = vmul.f32 %v1882, %v2145
    %v2178 = vmul.f32 %v1884, %v2146
    %v2179 = vmul.f32 %v1886, %v2147
    %v2180 = vmul.f32 %v1888, %v2148
    %v2181 = vmul.f32 %v1890, %v2149
    %v2182 = vmul.f32 %v1892, %v2150
    %v2183 = vmul.f32 %v1894, %v2151
    %v2184 = vmul.f32 %v1896, %v2152
    %2217 = vrot.lane.b32.xlu0 %v673, 32
    %v2218 = vpop.permute.xlu0 %2217
    %2219 = vrot.lane.b32.xlu0 %v678, 32
    %v2220 = vpop.permute.xlu0 %2219
    %2221 = vrot.lane.b32.xlu0 %v683, 32
    %v2222 = vpop.permute.xlu0 %2221
    %2223 = vrot.lane.b32.xlu0 %v688, 32
    %v2224 = vpop.permute.xlu0 %2223
    %2225 = vrot.lane.b32.xlu0 %v693, 32
    %v2226 = vpop.permute.xlu0 %2225
    %2227 = vrot.lane.b32.xlu0 %v698, 32
    %v2228 = vpop.permute.xlu0 %2227
    %2229 = vrot.lane.b32.xlu0 %v703, 32
    %v2230 = vpop.permute.xlu0 %2229
    %2231 = vrot.lane.b32.xlu0 %v708, 32
    %v2232 = vpop.permute.xlu0 %2231
    %2233 = vrot.lane.b32.xlu0 %v713, 32
    %v2234 = vpop.permute.xlu0 %2233
    %2235 = vrot.lane.b32.xlu0 %v718, 32
    %v2236 = vpop.permute.xlu0 %2235
    %2237 = vrot.lane.b32.xlu0 %v723, 32
    %v2238 = vpop.permute.xlu0 %2237
    %2239 = vrot.lane.b32.xlu0 %v728, 32
    %v2240 = vpop.permute.xlu0 %2239
    %2241 = vrot.lane.b32.xlu0 %v733, 32
    %v2242 = vpop.permute.xlu0 %2241
    %2243 = vrot.lane.b32.xlu0 %v738, 32
    %v2244 = vpop.permute.xlu0 %2243
    %2245 = vrot.lane.b32.xlu0 %v743, 32
    %v2246 = vpop.permute.xlu0 %2245
    %2247 = vrot.lane.b32.xlu0 %v748, 32
    %v2248 = vpop.permute.xlu0 %2247
    %2249 = vrot.lane.b32.xlu0 %v753, 32
    %v2250 = vpop.permute.xlu0 %2249
    %2251 = vrot.lane.b32.xlu0 %v758, 32
    %v2252 = vpop.permute.xlu0 %2251
    %2253 = vrot.lane.b32.xlu0 %v763, 32
    %v2254 = vpop.permute.xlu0 %2253
    %2255 = vrot.lane.b32.xlu0 %v768, 32
    %v2256 = vpop.permute.xlu0 %2255
    %2257 = vrot.lane.b32.xlu0 %v773, 32
    %v2258 = vpop.permute.xlu0 %2257
    %2259 = vrot.lane.b32.xlu0 %v778, 32
    %v2260 = vpop.permute.xlu0 %2259
    %2261 = vrot.lane.b32.xlu0 %v783, 32
    %v2262 = vpop.permute.xlu0 %2261
    %2263 = vrot.lane.b32.xlu0 %v788, 32
    %v2264 = vpop.permute.xlu0 %2263
    %2265 = vrot.lane.b32.xlu0 %v793, 32
    %v2266 = vpop.permute.xlu0 %2265
    %2267 = vrot.lane.b32.xlu0 %v798, 32
    %v2268 = vpop.permute.xlu0 %2267
    %2269 = vrot.lane.b32.xlu0 %v803, 32
    %v2270 = vpop.permute.xlu0 %2269
    %2271 = vrot.lane.b32.xlu0 %v808, 32
    %v2272 = vpop.permute.xlu0 %2271
    %2273 = vrot.lane.b32.xlu0 %v813, 32
    %v2274 = vpop.permute.xlu0 %2273
    %2275 = vrot.lane.b32.xlu0 %v818, 32
    %v2276 = vpop.permute.xlu0 %2275
    %2277 = vrot.lane.b32.xlu0 %v823, 32
    %v2278 = vpop.permute.xlu0 %2277
    %2279 = vrot.lane.b32.xlu0 %v828, 32
    %v2280 = vpop.permute.xlu0 %2279
    %v2313 = vadd.f32 %v255, %v2218
    %v2314 = vadd.f32 %v260, %v2220
    %v2315 = vadd.f32 %v265, %v2222
    %v2316 = vadd.f32 %v270, %v2224
    %v2317 = vadd.f32 %v275, %v2226
    %v2318 = vadd.f32 %v280, %v2228
    %v2319 = vadd.f32 %v285, %v2230
    %v2320 = vadd.f32 %v290, %v2232
    %v2321 = vadd.f32 %v295, %v2234
    %v2322 = vadd.f32 %v300, %v2236
    %v2323 = vadd.f32 %v305, %v2238
    %v2324 = vadd.f32 %v310, %v2240
    %v2325 = vadd.f32 %v315, %v2242
    %v2326 = vadd.f32 %v320, %v2244
    %v2327 = vadd.f32 %v325, %v2246
    %v2328 = vadd.f32 %v330, %v2248
    %v2329 = vadd.f32 %v335, %v2250
    %v2330 = vadd.f32 %v340, %v2252
    %v2331 = vadd.f32 %v345, %v2254
    %v2332 = vadd.f32 %v350, %v2256
    %v2333 = vadd.f32 %v355, %v2258
    %v2334 = vadd.f32 %v360, %v2260
    %v2335 = vadd.f32 %v365, %v2262
    %v2336 = vadd.f32 %v370, %v2264
    %v2337 = vadd.f32 %v375, %v2266
    %v2338 = vadd.f32 %v380, %v2268
    %v2339 = vadd.f32 %v385, %v2270
    %v2340 = vadd.f32 %v390, %v2272
    %v2341 = vadd.f32 %v395, %v2274
    %v2342 = vadd.f32 %v400, %v2276
    %v2343 = vadd.f32 %v405, %v2278
    %v2344 = vadd.f32 %v410, %v2280
    %2377 = vrot.lane.b32.xlu0 %v2313, 96
    %v2378 = vpop.permute.xlu0 %2377
    %2379 = vrot.lane.b32.xlu0 %v2314, 96
    %v2380 = vpop.permute.xlu0 %2379
    %2381 = vrot.lane.b32.xlu0 %v2315, 96
    %v2382 = vpop.permute.xlu0 %2381
    %2383 = vrot.lane.b32.xlu0 %v2316, 96
    %v2384 = vpop.permute.xlu0 %2383
    %2385 = vrot.lane.b32.xlu0 %v2317, 96
    %v2386 = vpop.permute.xlu0 %2385
    %2387 = vrot.lane.b32.xlu0 %v2318, 96
    %v2388 = vpop.permute.xlu0 %2387
    %2389 = vrot.lane.b32.xlu0 %v2319, 96
    %v2390 = vpop.permute.xlu0 %2389
    %2391 = vrot.lane.b32.xlu0 %v2320, 96
    %v2392 = vpop.permute.xlu0 %2391
    %2393 = vrot.lane.b32.xlu0 %v2321, 96
    %v2394 = vpop.permute.xlu0 %2393
    %2395 = vrot.lane.b32.xlu0 %v2322, 96
    %v2396 = vpop.permute.xlu0 %2395
    %2397 = vrot.lane.b32.xlu0 %v2323, 96
    %v2398 = vpop.permute.xlu0 %2397
    %2399 = vrot.lane.b32.xlu0 %v2324, 96
    %v2400 = vpop.permute.xlu0 %2399
    %2401 = vrot.lane.b32.xlu0 %v2325, 96
    %v2402 = vpop.permute.xlu0 %2401
    %2403 = vrot.lane.b32.xlu0 %v2326, 96
    %v2404 = vpop.permute.xlu0 %2403
    %2405 = vrot.lane.b32.xlu0 %v2327, 96
    %v2406 = vpop.permute.xlu0 %2405
    %2407 = vrot.lane.b32.xlu0 %v2328, 96
    %v2408 = vpop.permute.xlu0 %2407
    %2409 = vrot.lane.b32.xlu0 %v2329, 96
    %v2410 = vpop.permute.xlu0 %2409
    %2411 = vrot.lane.b32.xlu0 %v2330, 96
    %v2412 = vpop.permute.xlu0 %2411
    %2413 = vrot.lane.b32.xlu0 %v2331, 96
    %v2414 = vpop.permute.xlu0 %2413
    %2415 = vrot.lane.b32.xlu0 %v2332, 96
    %v2416 = vpop.permute.xlu0 %2415
    %2417 = vrot.lane.b32.xlu0 %v2333, 96
    %v2418 = vpop.permute.xlu0 %2417
    %2419 = vrot.lane.b32.xlu0 %v2334, 96
    %v2420 = vpop.permute.xlu0 %2419
    %2421 = vrot.lane.b32.xlu0 %v2335, 96
    %v2422 = vpop.permute.xlu0 %2421
    %2423 = vrot.lane.b32.xlu0 %v2336, 96
    %v2424 = vpop.permute.xlu0 %2423
    %2425 = vrot.lane.b32.xlu0 %v2337, 96
    %v2426 = vpop.permute.xlu0 %2425
    %2427 = vrot.lane.b32.xlu0 %v2338, 96
    %v2428 = vpop.permute.xlu0 %2427
    %2429 = vrot.lane.b32.xlu0 %v2339, 96
    %v2430 = vpop.permute.xlu0 %2429
    %2431 = vrot.lane.b32.xlu0 %v2340, 96
    %v2432 = vpop.permute.xlu0 %2431
    %2433 = vrot.lane.b32.xlu0 %v2341, 96
    %v2434 = vpop.permute.xlu0 %2433
    %2435 = vrot.lane.b32.xlu0 %v2342, 96
    %v2436 = vpop.permute.xlu0 %2435
    %2437 = vrot.lane.b32.xlu0 %v2343, 96
    %v2438 = vpop.permute.xlu0 %2437
    %2439 = vrot.lane.b32.xlu0 %v2344, 96
    %v2440 = vpop.permute.xlu0 %2439
    %v2473 = vmul.f32 %v2153, %v2378
    %v2474 = vmul.f32 %v2154, %v2380
    %v2475 = vmul.f32 %v2155, %v2382
    %v2476 = vmul.f32 %v2156, %v2384
    %v2477 = vmul.f32 %v2157, %v2386
    %v2478 = vmul.f32 %v2158, %v2388
    %v2479 = vmul.f32 %v2159, %v2390
    %v2480 = vmul.f32 %v2160, %v2392
    %v2481 = vmul.f32 %v2161, %v2394
    %v2482 = vmul.f32 %v2162, %v2396
    %v2483 = vmul.f32 %v2163, %v2398
    %v2484 = vmul.f32 %v2164, %v2400
    %v2485 = vmul.f32 %v2165, %v2402
    %v2486 = vmul.f32 %v2166, %v2404
    %v2487 = vmul.f32 %v2167, %v2406
    %v2488 = vmul.f32 %v2168, %v2408
    %v2489 = vmul.f32 %v2169, %v2410
    %v2490 = vmul.f32 %v2170, %v2412
    %v2491 = vmul.f32 %v2171, %v2414
    %v2492 = vmul.f32 %v2172, %v2416
    %v2493 = vmul.f32 %v2173, %v2418
    %v2494 = vmul.f32 %v2174, %v2420
    %v2495 = vmul.f32 %v2175, %v2422
    %v2496 = vmul.f32 %v2176, %v2424
    %v2497 = vmul.f32 %v2177, %v2426
    %v2498 = vmul.f32 %v2178, %v2428
    %v2499 = vmul.f32 %v2179, %v2430
    %v2500 = vmul.f32 %v2180, %v2432
    %v2501 = vmul.f32 %v2181, %v2434
    %v2502 = vmul.f32 %v2182, %v2436
    %v2503 = vmul.f32 %v2183, %v2438
    %v2504 = vmul.f32 %v2184, %v2440
    %v2505 = vsel %vm541, %v2473, 0.0
    %v2506 = vrot.slane %v2505, 4
    %v2507 = vadd.f32 %v2505, %v2506
    %v2508 = vrot.slane %v2507, 2
    %v2509 = vadd.f32 %v2507, %v2508
    %v2510 = vrot.slane %v2509, 1
    %v2511 = vadd.f32 %v2509, %v2510
    %v2512 = vsel %vm541, %v2474, 0.0
    %v2513 = vrot.slane %v2512, 4
    %v2514 = vadd.f32 %v2512, %v2513
    %v2515 = vrot.slane %v2514, 2
    %v2516 = vadd.f32 %v2514, %v2515
    %v2517 = vrot.slane %v2516, 1
    %v2518 = vadd.f32 %v2516, %v2517
    %v2519 = vsel %vm541, %v2475, 0.0
    %v2520 = vrot.slane %v2519, 4
    %v2521 = vadd.f32 %v2519, %v2520
    %v2522 = vrot.slane %v2521, 2
    %v2523 = vadd.f32 %v2521, %v2522
    %v2524 = vrot.slane %v2523, 1
    %v2525 = vadd.f32 %v2523, %v2524
    %v2526 = vsel %vm541, %v2476, 0.0
    %v2527 = vrot.slane %v2526, 4
    %v2528 = vadd.f32 %v2526, %v2527
    %v2529 = vrot.slane %v2528, 2
    %v2530 = vadd.f32 %v2528, %v2529
    %v2531 = vrot.slane %v2530, 1
    %v2532 = vadd.f32 %v2530, %v2531
    %v2533 = vsel %vm541, %v2477, 0.0
    %v2534 = vrot.slane %v2533, 4
    %v2535 = vadd.f32 %v2533, %v2534
    %v2536 = vrot.slane %v2535, 2
    %v2537 = vadd.f32 %v2535, %v2536
    %v2538 = vrot.slane %v2537, 1
    %v2539 = vadd.f32 %v2537, %v2538
    %v2540 = vsel %vm541, %v2478, 0.0
    %v2541 = vrot.slane %v2540, 4
    %v2542 = vadd.f32 %v2540, %v2541
    %v2543 = vrot.slane %v2542, 2
    %v2544 = vadd.f32 %v2542, %v2543
    %v2545 = vrot.slane %v2544, 1
    %v2546 = vadd.f32 %v2544, %v2545
    %v2547 = vsel %vm541, %v2479, 0.0
    %v2548 = vrot.slane %v2547, 4
    %v2549 = vadd.f32 %v2547, %v2548
    %v2550 = vrot.slane %v2549, 2
    %v2551 = vadd.f32 %v2549, %v2550
    %v2552 = vrot.slane %v2551, 1
    %v2553 = vadd.f32 %v2551, %v2552
    %v2554 = vsel %vm541, %v2480, 0.0
    %v2555 = vrot.slane %v2554, 4
    %v2556 = vadd.f32 %v2554, %v2555
    %v2557 = vrot.slane %v2556, 2
    %v2558 = vadd.f32 %v2556, %v2557
    %v2559 = vrot.slane %v2558, 1
    %v2560 = vadd.f32 %v2558, %v2559
    %v2561 = vsel %vm541, %v2481, 0.0
    %v2562 = vrot.slane %v2561, 4
    %v2563 = vadd.f32 %v2561, %v2562
    %v2564 = vrot.slane %v2563, 2
    %v2565 = vadd.f32 %v2563, %v2564
    %v2566 = vrot.slane %v2565, 1
    %v2567 = vadd.f32 %v2565, %v2566
    %v2568 = vsel %vm541, %v2482, 0.0
    %v2569 = vrot.slane %v2568, 4
    %v2570 = vadd.f32 %v2568, %v2569
    %v2571 = vrot.slane %v2570, 2
    %v2572 = vadd.f32 %v2570, %v2571
    %v2573 = vrot.slane %v2572, 1
    %v2574 = vadd.f32 %v2572, %v2573
    %v2575 = vsel %vm541, %v2483, 0.0
    %v2576 = vrot.slane %v2575, 4
    %v2577 = vadd.f32 %v2575, %v2576
    %v2578 = vrot.slane %v2577, 2
    %v2579 = vadd.f32 %v2577, %v2578
    %v2580 = vrot.slane %v2579, 1
    %v2581 = vadd.f32 %v2579, %v2580
    %v2582 = vsel %vm541, %v2484, 0.0
    %v2583 = vrot.slane %v2582, 4
    %v2584 = vadd.f32 %v2582, %v2583
    %v2585 = vrot.slane %v2584, 2
    %v2586 = vadd.f32 %v2584, %v2585
    %v2587 = vrot.slane %v2586, 1
    %v2588 = vadd.f32 %v2586, %v2587
    %v2589 = vsel %vm541, %v2485, 0.0
    %v2590 = vrot.slane %v2589, 4
    %v2591 = vadd.f32 %v2589, %v2590
    %v2592 = vrot.slane %v2591, 2
    %v2593 = vadd.f32 %v2591, %v2592
    %v2594 = vrot.slane %v2593, 1
    %v2595 = vadd.f32 %v2593, %v2594
    %v2596 = vsel %vm541, %v2486, 0.0
    %v2597 = vrot.slane %v2596, 4
    %v2598 = vadd.f32 %v2596, %v2597
    %v2599 = vrot.slane %v2598, 2
    %v2600 = vadd.f32 %v2598, %v2599
    %v2601 = vrot.slane %v2600, 1
    %v2602 = vadd.f32 %v2600, %v2601
    %v2603 = vsel %vm541, %v2487, 0.0
    %v2604 = vrot.slane %v2603, 4
    %v2605 = vadd.f32 %v2603, %v2604
    %v2606 = vrot.slane %v2605, 2
    %v2607 = vadd.f32 %v2605, %v2606
    %v2608 = vrot.slane %v2607, 1
    %v2609 = vadd.f32 %v2607, %v2608
    %v2610 = vsel %vm541, %v2488, 0.0
    %v2611 = vrot.slane %v2610, 4
    %v2612 = vadd.f32 %v2610, %v2611
    %v2613 = vrot.slane %v2612, 2
    %v2614 = vadd.f32 %v2612, %v2613
    %v2615 = vrot.slane %v2614, 1
    %v2616 = vadd.f32 %v2614, %v2615
    %v2617 = vsel %vm541, %v2489, 0.0
    %v2618 = vrot.slane %v2617, 4
    %v2619 = vadd.f32 %v2617, %v2618
    %v2620 = vrot.slane %v2619, 2
    %v2621 = vadd.f32 %v2619, %v2620
    %v2622 = vrot.slane %v2621, 1
    %v2623 = vadd.f32 %v2621, %v2622
    %v2624 = vsel %vm541, %v2490, 0.0
    %v2625 = vrot.slane %v2624, 4
    %v2626 = vadd.f32 %v2624, %v2625
    %v2627 = vrot.slane %v2626, 2
    %v2628 = vadd.f32 %v2626, %v2627
    %v2629 = vrot.slane %v2628, 1
    %v2630 = vadd.f32 %v2628, %v2629
    %v2631 = vsel %vm541, %v2491, 0.0
    %v2632 = vrot.slane %v2631, 4
    %v2633 = vadd.f32 %v2631, %v2632
    %v2634 = vrot.slane %v2633, 2
    %v2635 = vadd.f32 %v2633, %v2634
    %v2636 = vrot.slane %v2635, 1
    %v2637 = vadd.f32 %v2635, %v2636
    %v2638 = vsel %vm541, %v2492, 0.0
    %v2639 = vrot.slane %v2638, 4
    %v2640 = vadd.f32 %v2638, %v2639
    %v2641 = vrot.slane %v2640, 2
    %v2642 = vadd.f32 %v2640, %v2641
    %v2643 = vrot.slane %v2642, 1
    %v2644 = vadd.f32 %v2642, %v2643
    %v2645 = vsel %vm541, %v2493, 0.0
    %v2646 = vrot.slane %v2645, 4
    %v2647 = vadd.f32 %v2645, %v2646
    %v2648 = vrot.slane %v2647, 2
    %v2649 = vadd.f32 %v2647, %v2648
    %v2650 = vrot.slane %v2649, 1
    %v2651 = vadd.f32 %v2649, %v2650
    %v2652 = vsel %vm541, %v2494, 0.0
    %v2653 = vrot.slane %v2652, 4
    %v2654 = vadd.f32 %v2652, %v2653
    %v2655 = vrot.slane %v2654, 2
    %v2656 = vadd.f32 %v2654, %v2655
    %v2657 = vrot.slane %v2656, 1
    %v2658 = vadd.f32 %v2656, %v2657
    %v2659 = vsel %vm541, %v2495, 0.0
    %v2660 = vrot.slane %v2659, 4
    %v2661 = vadd.f32 %v2659, %v2660
    %v2662 = vrot.slane %v2661, 2
    %v2663 = vadd.f32 %v2661, %v2662
    %v2664 = vrot.slane %v2663, 1
    %v2665 = vadd.f32 %v2663, %v2664
    %v2666 = vsel %vm541, %v2496, 0.0
    %v2667 = vrot.slane %v2666, 4
    %v2668 = vadd.f32 %v2666, %v2667
    %v2669 = vrot.slane %v2668, 2
    %v2670 = vadd.f32 %v2668, %v2669
    %v2671 = vrot.slane %v2670, 1
    %v2672 = vadd.f32 %v2670, %v2671
    %v2673 = vsel %vm541, %v2497, 0.0
    %v2674 = vrot.slane %v2673, 4
    %v2675 = vadd.f32 %v2673, %v2674
    %v2676 = vrot.slane %v2675, 2
    %v2677 = vadd.f32 %v2675, %v2676
    %v2678 = vrot.slane %v2677, 1
    %v2679 = vadd.f32 %v2677, %v2678
    %v2680 = vsel %vm541, %v2498, 0.0
    %v2681 = vrot.slane %v2680, 4
    %v2682 = vadd.f32 %v2680, %v2681
    %v2683 = vrot.slane %v2682, 2
    %v2684 = vadd.f32 %v2682, %v2683
    %v2685 = vrot.slane %v2684, 1
    %v2686 = vadd.f32 %v2684, %v2685
    %v2687 = vsel %vm541, %v2499, 0.0
    %v2688 = vrot.slane %v2687, 4
    %v2689 = vadd.f32 %v2687, %v2688
    %v2690 = vrot.slane %v2689, 2
    %v2691 = vadd.f32 %v2689, %v2690
    %v2692 = vrot.slane %v2691, 1
    %v2693 = vadd.f32 %v2691, %v2692
    %v2694 = vsel %vm541, %v2500, 0.0
    %v2695 = vrot.slane %v2694, 4
    %v2696 = vadd.f32 %v2694, %v2695
    %v2697 = vrot.slane %v2696, 2
    %v2698 = vadd.f32 %v2696, %v2697
    %v2699 = vrot.slane %v2698, 1
    %v2700 = vadd.f32 %v2698, %v2699
    %v2701 = vsel %vm541, %v2501, 0.0
    %v2702 = vrot.slane %v2701, 4
    %v2703 = vadd.f32 %v2701, %v2702
    %v2704 = vrot.slane %v2703, 2
    %v2705 = vadd.f32 %v2703, %v2704
    %v2706 = vrot.slane %v2705, 1
    %v2707 = vadd.f32 %v2705, %v2706
    %v2708 = vsel %vm541, %v2502, 0.0
    %v2709 = vrot.slane %v2708, 4
    %v2710 = vadd.f32 %v2708, %v2709
    %v2711 = vrot.slane %v2710, 2
    %v2712 = vadd.f32 %v2710, %v2711
    %v2713 = vrot.slane %v2712, 1
    %v2714 = vadd.f32 %v2712, %v2713
    %v2715 = vsel %vm541, %v2503, 0.0
    %v2716 = vrot.slane %v2715, 4
    %v2717 = vadd.f32 %v2715, %v2716
    %v2718 = vrot.slane %v2717, 2
    %v2719 = vadd.f32 %v2717, %v2718
    %v2720 = vrot.slane %v2719, 1
    %v2721 = vadd.f32 %v2719, %v2720
    %v2722 = vsel %vm541, %v2504, 0.0
    %v2723 = vrot.slane %v2722, 4
    %v2724 = vadd.f32 %v2722, %v2723
    %v2725 = vrot.slane %v2724, 2
    %v2726 = vadd.f32 %v2724, %v2725
    %v2727 = vrot.slane %v2726, 1
    %v2728 = vadd.f32 %v2726, %v2727
    %v2729 = vlaneseq
    %v2730 = vshrl.u32 %v2729, 7
    %v2731 = vsub.s32 0, %v2730
    %v2732 = vrot.slane %v90, %v2731
    %vm2765 = vcmask 1041409
    %v2766 = vsel %vm2765, %v2518, %v2511
    %vm2767 = vcmask 1042434
    %v2768 = vsel %vm2767, %v2525, %v2766
    %vm2769 = vcmask 1043459
    %v2770 = vsel %vm2769, %v2532, %v2768
    %vm2771 = vcmask 1044484
    %v2772 = vsel %vm2771, %v2539, %v2770
    %vm2773 = vcmask 1045509
    %v2774 = vsel %vm2773, %v2546, %v2772
    %vm2775 = vcmask 1046534
    %v2776 = vsel %vm2775, %v2553, %v2774
    %vm2777 = vcmask 1047559
    %v2778 = vsel %vm2777, %v2560, %v2776
    %v2779 = vsel %vm2765, %v2574, %v2567
    %v2780 = vsel %vm2767, %v2581, %v2779
    %v2781 = vsel %vm2769, %v2588, %v2780
    %v2782 = vsel %vm2771, %v2595, %v2781
    %v2783 = vsel %vm2773, %v2602, %v2782
    %v2784 = vsel %vm2775, %v2609, %v2783
    %v2785 = vsel %vm2777, %v2616, %v2784
    %v2786 = vsel %vm2765, %v2630, %v2623
    %v2787 = vsel %vm2767, %v2637, %v2786
    %v2788 = vsel %vm2769, %v2644, %v2787
    %v2789 = vsel %vm2771, %v2651, %v2788
    %v2790 = vsel %vm2773, %v2658, %v2789
    %v2791 = vsel %vm2775, %v2665, %v2790
    %v2792 = vsel %vm2777, %v2672, %v2791
    %v2793 = vsel %vm2765, %v2686, %v2679
    %v2794 = vsel %vm2767, %v2693, %v2793
    %v2795 = vsel %vm2769, %v2700, %v2794
    %v2796 = vsel %vm2771, %v2707, %v2795
    %v2797 = vsel %vm2773, %v2714, %v2796
    %v2798 = vsel %vm2775, %v2721, %v2797
    %v2799 = vsel %vm2777, %v2728, %v2798
    %v2800 = vsel %vm541, %v2778, 0
    %v2802 = vsel %vm541, %v2785, 0
    %v2804 = vsel %vm541, %v2792, 0
    %v2806 = vsel %vm541, %v2799, 0
    %2808 = vmatprep.subr.mxu0 0.0
    %2809 = vmatpush1.msra.mxu0 %v84
    %2810 = vmatprep.subr.mxu0 0.0
    %2811 = vmatpush1.msra.mxu0 %v85
    %2812 = vmatprep.subr.mxu0 0.0
    %2813 = vmatpush1.msra.mxu0 %v86
    %2814 = vmatprep.subr.mxu0 0.0
    %2815 = vmatpush1.msra.mxu0 %v87
    %2816 = vmatprep.subr.mxu0 0.0
    %2817 = vmatpush1.msra.mxu0 0.0
    %2818 = vmatprep.subr.mxu0 0.0
    %2819 = vmatpush1.msra.mxu0 0.0
    %2820 = vmatprep.subr.mxu0 0.0
    %2821 = vmatpush1.msra.mxu0 0.0
    %2822 = vmatprep.subr.mxu0 0.0
    %2823 = vmatpush1.msra.mxu0 0.0
    %2824 = vmatprep.subr.mxu0 0.0
    %2825 = vmatpush1.msra.mxu0 0.0
    %2826 = vmatprep.subr.mxu0 0.0
    %2827 = vmatpush1.msra.mxu0 0.0
    %2828 = vmatprep.subr.mxu0 0.0
    %2829 = vmatpush1.msra.mxu0 0.0
    %2830 = vmatprep.subr.mxu0 0.0
    %2831 = vmatpush1.msra.mxu0 0.0
    %2832 = vmatprep.subr.mxu0 0.0
    %2833 = vmatpush1.msra.mxu0 0.0
    %2834 = vmatprep.subr.mxu0 0.0
    %2835 = vmatpush1.msra.mxu0 0.0
    %2836 = vmatprep.subr.mxu0 0.0
    %2837 = vmatpush1.msra.mxu0 0.0
    %2838 = vmatprep.subr.mxu0 0.0
    %2839 = vmatpush1.msra.mxu0 0.0
    %2840 = vmatprep.subr.mxu0 0.0
    %2841 = vmatpush1.msra.mxu0 0.0
    %2842 = vmatprep.subr.mxu0 0.0
    %2843 = vmatpush1.msra.mxu0 0.0
    %2844 = vmatprep.subr.mxu0 0.0
    %2845 = vmatpush1.msra.mxu0 0.0
    %2846 = vmatprep.subr.mxu0 0.0
    %2847 = vmatpush1.msra.mxu0 0.0
    %2848 = vmatprep.subr.mxu0 0.0
    %2849 = vmatpush1.msra.mxu0 0.0
    %2850 = vmatprep.subr.mxu0 0.0
    %2851 = vmatpush1.msra.mxu0 0.0
    %2852 = vmatprep.subr.mxu0 0.0
    %2853 = vmatpush1.msra.mxu0 0.0
    %2854 = vmatprep.subr.mxu0 0.0
    %2855 = vmatpush1.msra.mxu0 0.0
    %2856 = vmatprep.subr.mxu0 0.0
    %2857 = vmatpush1.msra.mxu0 0.0
    %2858 = vmatprep.subr.mxu0 0.0
    %2859 = vmatpush1.msra.mxu0 0.0
    %2860 = vmatprep.subr.mxu0 0.0
    %2861 = vmatpush1.msra.mxu0 0.0
    %2862 = vmatprep.subr.mxu0 0.0
    %2863 = vmatpush1.msra.mxu0 0.0
    %2864 = vmatprep.subr.mxu0 0.0
    %2865 = vmatpush1.msra.mxu0 0.0
    %2866 = vmatprep.subr.mxu0 0.0
    %2867 = vmatpush1.msra.mxu0 0.0
    %2868 = vmatprep.subr.mxu0 0.0
    %2869 = vmatpush1.msra.mxu0 0.0
    %2870 = vmatprep.subr.mxu0 0.0
    %2871 = vmatpush1.msra.mxu0 0.0
    %2872 = vmatprep.mubr.f32.mxu0 0.0
    %2873 = vmatmul.mubr.f32.gmra.mrb[0].mxu0 %v2800
    %v2874 = vpop.f32.mrb[0].mxu0
    %v2875 = vadd.f32 %v2732, %v2874
    %v2876 = vpop.f32.mrb[0].mxu0
    %2877 = vmatprep.mubr.f32.mxu0 0.0
    %2878 = vmatmul.mubr.f32.gmra.mrb[0].mxu0 %v2802
    %v2879 = vpop.f32.mrb[0].mxu0
    %v2880 = vadd.f32 %v2732, %v2879
    %v2881 = vpop.f32.mrb[0].mxu0
    %2882 = vmatprep.mubr.f32.mxu0 0.0
    %2883 = vmatmul.mubr.f32.gmra.mrb[0].mxu0 %v2804
    %v2884 = vpop.f32.mrb[0].mxu0
    %v2885 = vadd.f32 %v2732, %v2884
    %v2886 = vpop.f32.mrb[0].mxu0
    %2887 = vmatprep.mubr.f32.mxu0 0.0
    %2888 = vmatmul.mubr.f32.gmra.mrb[0].mxu0 %v2806
    %v2889 = vpop.f32.mrb[0].mxu0
    %v2890 = vadd.f32 %v2732, %v2889
    %v2891 = vpop.f32.mrb[0].mxu0
    %2892 = vdwg.mxu0
    %v2893 = vadd.f32 %v2875, %v24
    %v2894 = vadd.f32 %v2880, %v25
    %v2895 = vadd.f32 %v2885, %v26
    %v2896 = vadd.f32 %v2890, %v27
    %2897 = vst.msk [vmem:[#allocation2] sm:$0xff] %vm541, %v2893
    %2898 = vst.msk [vmem:[#allocation2 + $0x8] sm:$0xff] %vm541, %v2894
    %2899 = vst.msk [vmem:[#allocation2 + $0x10] sm:$0xff] %vm541, %v2895
    %2900 = vst.msk [vmem:[#allocation2 + $0x18] sm:$0xff] %vm541, %v2896
    %2901 = vst.msk [vmem:[#allocation4] sm:$0xff] %vm541, %v2153
    %2902 = vst.msk [vmem:[#allocation4 + $0x8] sm:$0xff] %vm541, %v2154
    %2903 = vst.msk [vmem:[#allocation4 + $0x10] sm:$0xff] %vm541, %v2155
    %2904 = vst.msk [vmem:[#allocation4 + $0x18] sm:$0xff] %vm541, %v2156
    %2905 = vst.msk [vmem:[#allocation4 + $0x20] sm:$0xff] %vm541, %v2157
    %2906 = vst.msk [vmem:[#allocation4 + $0x28] sm:$0xff] %vm541, %v2158
    %2907 = vst.msk [vmem:[#allocation4 + $0x30] sm:$0xff] %vm541, %v2159
    %2908 = vst.msk [vmem:[#allocation4 + $0x38] sm:$0xff] %vm541, %v2160
    %2909 = vst.msk [vmem:[#allocation4 + $0x40] sm:$0xff] %vm541, %v2161
    %2910 = vst.msk [vmem:[#allocation4 + $0x48] sm:$0xff] %vm541, %v2162
    %2911 = vst.msk [vmem:[#allocation4 + $0x50] sm:$0xff] %vm541, %v2163
    %2912 = vst.msk [vmem:[#allocation4 + $0x58] sm:$0xff] %vm541, %v2164
    %2913 = vst.msk [vmem:[#allocation4 + $0x60] sm:$0xff] %vm541, %v2165
    %2914 = vst.msk [vmem:[#allocation4 + $0x68] sm:$0xff] %vm541, %v2166
    %2915 = vst.msk [vmem:[#allocation4 + $0x70] sm:$0xff] %vm541, %v2167
    %2916 = vst.msk [vmem:[#allocation4 + $0x78] sm:$0xff] %vm541, %v2168
    %2917 = vst.msk [vmem:[#allocation4 + $0x80] sm:$0xff] %vm541, %v2169
    %2918 = vst.msk [vmem:[#allocation4 + $0x88] sm:$0xff] %vm541, %v2170
    %2919 = vst.msk [vmem:[#allocation4 + $0x90] sm:$0xff] %vm541, %v2171
    %2920 = vst.msk [vmem:[#allocation4 + $0x98] sm:$0xff] %vm541, %v2172
    %2921 = vst.msk [vmem:[#allocation4 + $0xa0] sm:$0xff] %vm541, %v2173
    %2922 = vst.msk [vmem:[#allocation4 + $0xa8] sm:$0xff] %vm541, %v2174
    %2923 = vst.msk [vmem:[#allocation4 + $0xb0] sm:$0xff] %vm541, %v2175
    %2924 = vst.msk [vmem:[#allocation4 + $0xb8] sm:$0xff] %vm541, %v2176
    %2925 = vst.msk [vmem:[#allocation4 + $0xc0] sm:$0xff] %vm541, %v2177
    %2926 = vst.msk [vmem:[#allocation4 + $0xc8] sm:$0xff] %vm541, %v2178
    %2927 = vst.msk [vmem:[#allocation4 + $0xd0] sm:$0xff] %vm541, %v2179
    %2928 = vst.msk [vmem:[#allocation4 + $0xd8] sm:$0xff] %vm541, %v2180
    %2929 = vst.msk [vmem:[#allocation4 + $0xe0] sm:$0xff] %vm541, %v2181
    %2930 = vst.msk [vmem:[#allocation4 + $0xe8] sm:$0xff] %vm541, %v2182
    %2931 = vst.msk [vmem:[#allocation4 + $0xf0] sm:$0xff] %vm541, %v2183
    %2932 = vst.msk [vmem:[#allocation4 + $0xf8] sm:$0xff] %vm541, %v2184
    // Predicated region
    $region22: #{point_transformer_cross_attn.1} parent=1 // pred_check
      _
    $region23: #{point_transformer_cross_attn.1} parent=1 // pred_check_branch
      %2934 = sbr.rel (0) target = $region25
    $region24: #{point_transformer_cross_attn.1} parent=1 // pred_region
      %s2936 = ssub.s32 512, 512
      %2937 = vsyncadd [#allocation3], %s2936
      %s2938 = sshll.u32 [#allocation2], 4
      %s2939 = int_to_ptr.vmem [resolvable:$true] %s2938
      %2944 = dma.vmem_to_hbm [thread:$0]  %s2939, 512, %s5, [#allocation3], 128, 128, 8
    $region25: #{point_transformer_cross_attn.1} parent=1 // pred_fallthru
      _
    // Predicated region
    $region26: #{point_transformer_cross_attn.1} parent=1 // pred_check
      _
    $region27: #{point_transformer_cross_attn.1} parent=1 // pred_check_branch
      %2946 = sbr.rel (0) target = $region29
    $region28: #{point_transformer_cross_attn.1} parent=1 // pred_region
      %s2948 = ssub.s32 4096, 4096
      %2949 = vsyncadd [#allocation5], %s2948
      %s2950 = sshll.u32 [#allocation4], 4
      %s2951 = int_to_ptr.vmem [resolvable:$true] %s2950
      %2956 = dma.vmem_to_hbm [thread:$0]  %s2951, 4096, %s6, [#allocation5], 128, 128, 8
    $region29: #{point_transformer_cross_attn.1} parent=1 // pred_fallthru
      _
    // Predicated region
    $region30: #{point_transformer_cross_attn.1} parent=1 // pred_check
      _
    $region31: #{point_transformer_cross_attn.1} parent=1 // pred_check_branch
      %2958 = sbr.rel (0) target = $region33
    $region32: #{point_transformer_cross_attn.1} parent=1 // pred_region
      %2959 = dma.done [#allocation3], 512
    $region33: #{point_transformer_cross_attn.1} parent=1 // pred_fallthru
      _
    // Predicated region
    $region34: #{point_transformer_cross_attn.1} parent=1 // pred_check
      _
    $region35: #{point_transformer_cross_attn.1} parent=1 // pred_check_branch
      %2961 = sbr.rel (0) target = $region37
    $region36: #{point_transformer_cross_attn.1} parent=1 // pred_region
      %2962 = dma.done [#allocation5], 4096
    $region37: #{point_transformer_cross_attn.1} parent=1 // pred_fallthru
      _
    %2963 = vsyncpa [#allocation3], 1
    %2964 = vsyncpa [#allocation5], 1

</llo_original>
